<compile_context>
chip_gen: v7x
topology: tpu7x:2x2x1
jax: 0.10.0
libtpu: 0.0.40
codegen_flags: <defaults>
</compile_context>

<pallas_src>
import numpy as np
import jax
import jax.numpy as jnp
from jax.experimental import pallas as pl
from jax.experimental.pallas import tpu as pltpu


# ------------------------------ Pallas kernel ------------------------------ #
def _pick_hw_tile(hw, cap=2048):
    """Largest lane-friendly HW tile: full HW if small, else a multiple-of-128
    divisor of HW <= cap (keeps double-buffered blocks well inside VMEM on
    v7x's 64 MiB as well as v5e/v6e's 128 MiB)."""
    if hw <= cap:
        return hw
    for t in range(cap - cap % 128, 127, -128):
        if hw % t == 0:
            return t
    return hw


def _run_kernel(x, pclean, pcband, sqc, resc, sqs, ress, coef):
    """x:      [B, C, T, HW]   full 16-channel image (channel 15 = cloud prob)
       pclean: [B, 13, T, HW]  time-permuted spectral bands
       pcband: [B, T, HW]      time-permuted cloud-probability band
       sqc/resc/sqs/ress: [B, T, HW] square / resampled masks (cloud, shadow)
       coef:   [B, T, 7]       per-(b,t) scalars
                               [rs1*.5, rs2*.5, rs3*.5, rs4*.5, rs5*.5+.4, fmult, fadd]
    """
    B, C, T, HW = x.shape
    C13 = pclean.shape[1]
    hw_tile = _pick_hw_tile(HW)
    n_hw = HW // hw_tile

    def kernel(x_ref, pclean_ref, pcband_ref,
               sqc_ref, resc_ref, sqs_ref, ress_ref, coef_ref, out_ref):
        coef_t = coef_ref[0]                      # (T, 7)
        c1 = coef_t[:, 0:1]                       # rs1*0.5   (cloud square)
        c2 = coef_t[:, 1:2]                       # rs2*0.5   (cloud resampled)
        c3 = coef_t[:, 2:3]                       # rs3*0.5   (shadow square)
        c4 = coef_t[:, 3:4]                       # rs4*0.5   (shadow resampled)
        c5 = coef_t[:, 4:5]                       # rs5*0.5 + 0.4 (shadow darken)
        fmult = coef_t[:, 5:6]                    # temporal-dropout multiplier
        fadd = coef_t[:, 6:7]                     # temporal-dropout additive term

        cband = x_ref[0, 15]                      # (T, hw_tile) cloud probability
        pcband_t = pcband_ref[0]                  # (T, hw_tile) permuted cloud prob

        cloud_mask = jnp.maximum(sqc_ref[0] * c1, resc_ref[0] * c2)
        shadow_mask = jnp.maximum(sqs_ref[0] * c3, ress_ref[0] * c4)

        thr = 0.3
        inv = 1.0 / (1.0 - thr)
        cmask = (jnp.clip(cband, thr, 1.0) - thr) * inv
        pcmask = (jnp.clip(pcband_t, thr, 1.0) - thr) * inv
        interp = pcmask * (1.0 - cmask)

        # Folded per-pixel coefficients: noisy = clean*A + perm_clean*B + C
        coef_a = fmult * (1.0 - shadow_mask * c5) * (1.0 - interp)
        coef_b = (fmult * interp) * pcmask
        coef_c = fmult * cloud_mask + fadd

        for ch in range(C13):                     # 13 spectral bands
            out_ref[0, ch] = (x_ref[0, ch] * coef_a
                              + pclean_ref[0, ch] * coef_b + coef_c)
        for ch in range(C13, C):                  # channels 13..15 pass through
            out_ref[0, ch] = x_ref[0, ch]

    x_map = lambda b, j: (b, 0, 0, j)
    m_map = lambda b, j: (b, 0, j)
    c_map = lambda b, j: (b, 0, 0)

    return pl.pallas_call(
        kernel,
        out_shape=jax.ShapeDtypeStruct((B, C, T, HW), jnp.float32),
        grid=(B, n_hw),
        in_specs=[
            pl.BlockSpec((1, C, T, hw_tile), x_map),     # full 16-channel slab
            pl.BlockSpec((1, C13, T, hw_tile), x_map),   # permuted 13 bands
            pl.BlockSpec((1, T, hw_tile), m_map),        # permuted cloud prob
            pl.BlockSpec((1, T, hw_tile), m_map),        # square mask (cloud)
            pl.BlockSpec((1, T, hw_tile), m_map),        # resampled cloud
            pl.BlockSpec((1, T, hw_tile), m_map),        # square mask (shadow)
            pl.BlockSpec((1, T, hw_tile), m_map),        # resampled shadow
            pl.BlockSpec((1, T, 7), c_map),              # per-(b,t) scalars
        ],
        out_specs=pl.BlockSpec((1, C, T, hw_tile), x_map),
        compiler_params=pltpu.CompilerParams(
            dimension_semantics=("parallel", "parallel"),
            vmem_limit_bytes=48 * 1024 * 1024),
    )(x, pclean, pcband, sqc, resc, sqs, ress, coef)


# ------------------------ plain-JAX / host random glue ---------------------- #
def _square_mask(rng, key, B, T, H, W):
    """SquareMaskGenerator (13-channel expand done by broadcast in the kernel)."""
    mask_scale = int(rng.choice([16, 32, 64]))
    threshold = float(rng.uniform(0.1, 0.25))
    prob = threshold / float((mask_scale * 2) ** 2)
    mask = (jax.random.uniform(key, (B, T, H, W)) < prob).astype(jnp.float32)
    ksz = mask_scale + 1
    pad = (mask_scale + 1) // 2
    # F.max_pool2d(mask, ksz, stride=1, padding=pad)  (pads with -inf)
    return jax.lax.reduce_window(
        mask, jnp.array(-jnp.inf, dtype=jnp.float32), jax.lax.max,
        window_dimensions=(1, 1, ksz, ksz),
        window_strides=(1, 1, 1, 1),
        padding=((0, 0), (0, 0), (pad, pad), (pad, pad)))


def _random_cloud(rng, cloud):
    """RandomCloudGenerator on [B, T, H, W] (size-1 channel dim dropped)."""
    B, T, H, W = cloud.shape
    c = cloud[np.asarray(rng.permutation(B))][:, np.asarray(rng.permutation(T))]
    if rng.random() > 0.5:
        c = jnp.flip(c, axis=2)          # torch dim 3 (H)
    if rng.random() > 0.5:
        c = jnp.flip(c, axis=3)          # torch dim 4 (W)
    if rng.random() > 0.5:
        c = jnp.rot90(c, 1, axes=(2, 3))
    return c


def noisy_process(clean_imgs, key):
    """Forward pass of NoisyProcess. clean_imgs: [B, C>=16, T, H, W] float32."""
    B, C, T, H, W = clean_imgs.shape
    assert C >= 16, "NoisyProcess expects >=16 channels (channel 15 = cloud prob)"
    HW = H * W

    # Host RNG for structural/branch choices (mirrors np.random / torch.rand(1)
    # coins in the eager PyTorch module); jax RNG for per-element randoms.
    kh, kd = jax.random.split(key)
    rng = np.random.default_rng(int(jax.random.randint(kh, (), 0, 2**31 - 1)))
    ks = jax.random.split(kd, 9)

    cloud_band_4d = clean_imgs[:, 15]                 # [B, T, H, W]
    sq_cloud = _square_mask(rng, ks[0], B, T, H, W)
    res_cloud = _random_cloud(rng, cloud_band_4d)
    sq_shadow = _square_mask(rng, ks[1], B, T, H, W)
    res_shadow = _random_cloud(rng, cloud_band_4d)

    rs1 = jax.random.uniform(ks[2], (B, T))
    rs2 = jax.random.uniform(ks[3], (B, T))
    rs3 = jax.random.uniform(ks[4], (B, T))
    rs4 = jax.random.uniform(ks[5], (B, T))
    rs5 = jax.random.uniform(ks[6], (B, T))

    perm = np.asarray(rng.permutation(T), dtype=np.int32)

    # time_span >= 8 branch: the data-dependent Python `if` of the original is
    # resolved eagerly on host (matches PyTorch eager semantics); the resulting
    # affine transform (fmult, fadd) is applied inside the kernel.
    # TODO(synk): under jit this host branch (and the host RNG coins above)
    # would need lax.cond / on-device decisions instead of Python `if`.
    fmult = jnp.ones((B, T), jnp.float32)
    fadd = jnp.zeros((B, T), jnp.float32)
    if T >= 8:
        cm = jnp.maximum(sq_cloud * rs1[:, :, None, None] * 0.5,
                         res_cloud * rs2[:, :, None, None] * 0.5)
        btcm = jnp.mean(cm, axis=(2, 3)) > 0.95       # mean over 13 identical ch
        if int(jnp.sum(btcm)) < T // 2:
            rbtcm = (jax.random.uniform(ks[7], (B, T)) > 0.75).astype(jnp.float32)
            fmult = 1.0 - rbtcm
            if rng.random() > 0.5:
                rs6 = jax.random.uniform(ks[8], (B, T))
                fadd = jnp.clip(rbtcm * rs6 * 2.0, 0.0, 1.0)

    coef = jnp.stack([rs1 * 0.5, rs2 * 0.5, rs3 * 0.5, rs4 * 0.5,
                      rs5 * 0.5 + 0.4, fmult, fadd], axis=-1).astype(jnp.float32)

    # Layout: pure reshape (no transpose, no scatter) — see header comment.
    x = clean_imgs.reshape(B, C, T, HW).astype(jnp.float32)
    pclean = x[:, :13][:, :, perm]                    # [B, 13, T, HW]
    pcband = x[:, 15][:, perm]                        # [B, T, HW]
    sqc = sq_cloud.reshape(B, T, HW).astype(jnp.float32)
    resc = res_cloud.reshape(B, T, HW).astype(jnp.float32)
    sqs = sq_shadow.reshape(B, T, HW).astype(jnp.float32)
    ress = res_shadow.reshape(B, T, HW).astype(jnp.float32)

    noisy = _run_kernel(x, pclean, pcband, sqc, resc, sqs, ress, coef)

    inputs = dict(x=x, pclean=pclean, pcband=pcband,
                  sqc=sqc, resc=resc, sqs=sqs, ress=ress, coef=coef)
    return noisy.reshape(B, C, T, H, W), inputs


# ---------------------------- pure-JAX reference ---------------------------- #
def _reference(x, pclean, pcband, sqc, resc, sqs, ress, coef):
    """Unfused reference mirroring the PyTorch op order (validates the kernel's
    coefficient folding as well)."""
    col = lambda i: coef[:, :, i][:, :, None]         # (B, T, 1)
    c1, c2, c3, c4, c5, fmult, fadd = (col(i) for i in range(7))
    cband = x[:, 15]
    cloud_mask = jnp.maximum(sqc * c1, resc * c2)
    shadow_mask = jnp.maximum(sqs * c3, ress * c4)
    thr = 0.3
    cmask = (jnp.clip(cband, thr, 1.0) - thr) / (1.0 - thr)
    pcmask = (jnp.clip(pcband, thr, 1.0) - thr) / (1.0 - thr)
    interp = pcmask * (1.0 - cmask)

    noisy13 = x[:, :13] * (1.0 - shadow_mask * c5)[:, None]
    noisy13 = (noisy13 * (1.0 - interp)[:, None]
               + (pclean * pcmask[:, None]) * interp[:, None])
    noisy13 = noisy13 + cloud_mask[:, None]
    noisy13 = noisy13 * fmult[:, None] + fadd[:, None]
    return jnp.concatenate([noisy13, x[:, 13:]], axis=1)


# ------------------------------------ main ---------------------------------- #
if __name__ == "__main__":
    # args: train_bs=2, time_span=8, image_size=16, 16 input channels
    B, C, T, H, W = 2, 16, 8, 16, 16
    key = jax.random.PRNGKey(0)
    k_in, k_proc = jax.random.split(key)
    clean_imgs = jax.random.uniform(k_in, (B, C, T, H, W), dtype=jnp.float32)

    out, inputs = noisy_process(clean_imgs, k_proc)
    out = jax.block_until_ready(out)

    ref = _reference(**inputs).reshape(B, C, T, H, W)
    np.testing.assert_allclose(np.asarray(out), np.asarray(ref),
                               rtol=1e-5, atol=1e-5)
    assert out.shape == (B, C, T, H, W)
    print("KERNEL_OK")
</pallas_src>

<mosaic_0001>
module attributes {stable_mosaic.version = 11 : i64} {
  func.func @kernel(%arg0: i32, %arg1: i32, %arg2: memref<1x16x8x256xf32, #tpu.memory_space<vmem>>, %arg3: memref<1x13x8x256xf32, #tpu.memory_space<vmem>>, %arg4: memref<1x8x256xf32, #tpu.memory_space<vmem>>, %arg5: memref<1x8x256xf32, #tpu.memory_space<vmem>>, %arg6: memref<1x8x256xf32, #tpu.memory_space<vmem>>, %arg7: memref<1x8x256xf32, #tpu.memory_space<vmem>>, %arg8: memref<1x8x256xf32, #tpu.memory_space<vmem>>, %arg9: memref<1x8x7xf32, #tpu.memory_space<vmem>>, %arg10: memref<1x16x8x256xf32, #tpu.memory_space<vmem>>) attributes {dimension_semantics = [#tpu.dimension_semantics<parallel>, #tpu.dimension_semantics<parallel>], iteration_bounds = array<i64: 2, 1>, scalar_prefetch = 0 : i64, scratch_operands = 0 : i64, tpu.core_type = #tpu.core_type<tc>, window_params = [{transform_indices = @transform_0, window_bounds = array<i64: 1, 16, 8, 256>}, {transform_indices = @transform_1, window_bounds = array<i64: 1, 13, 8, 256>}, {transform_indices = @transform_2, window_bounds = array<i64: 1, 8, 256>}, {transform_indices = @transform_3, window_bounds = array<i64: 1, 8, 256>}, {transform_indices = @transform_4, window_bounds = array<i64: 1, 8, 256>}, {transform_indices = @transform_5, window_bounds = array<i64: 1, 8, 256>}, {transform_indices = @transform_6, window_bounds = array<i64: 1, 8, 256>}, {transform_indices = @transform_7, window_bounds = array<i64: 1, 8, 7>}, {transform_indices = @transform_8, window_bounds = array<i64: 1, 16, 8, 256>}]} {
    %c0 = arith.constant 0 : index
    %c0_0 = arith.constant 0 : index
    %c0_1 = arith.constant 0 : index
    %0 = vector.load %arg9[%c0, %c0_0, %c0_1] : memref<1x8x7xf32, #tpu.memory_space<vmem>>, vector<1x8x7xf32>
    %1 = vector.shape_cast %0 : vector<1x8x7xf32> to vector<8x7xf32>
    %2 = vector.extract_strided_slice %1 {offsets = [0, 0], sizes = [8, 1], strides = [1, 1]} : vector<8x7xf32> to vector<8x1xf32>
    %3 = vector.extract_strided_slice %1 {offsets = [0, 1], sizes = [8, 1], strides = [1, 1]} : vector<8x7xf32> to vector<8x1xf32>
    %4 = vector.extract_strided_slice %1 {offsets = [0, 2], sizes = [8, 1], strides = [1, 1]} : vector<8x7xf32> to vector<8x1xf32>
    %5 = vector.extract_strided_slice %1 {offsets = [0, 3], sizes = [8, 1], strides = [1, 1]} : vector<8x7xf32> to vector<8x1xf32>
    %6 = vector.extract_strided_slice %1 {offsets = [0, 4], sizes = [8, 1], strides = [1, 1]} : vector<8x7xf32> to vector<8x1xf32>
    %7 = vector.extract_strided_slice %1 {offsets = [0, 5], sizes = [8, 1], strides = [1, 1]} : vector<8x7xf32> to vector<8x1xf32>
    %8 = vector.extract_strided_slice %1 {offsets = [0, 6], sizes = [8, 1], strides = [1, 1]} : vector<8x7xf32> to vector<8x1xf32>
    %c0_2 = arith.constant 0 : index
    %c15 = arith.constant 15 : index
    %c0_3 = arith.constant 0 : index
    %c0_4 = arith.constant 0 : index
    %9 = vector.load %arg2[%c0_2, %c15, %c0_3, %c0_4] : memref<1x16x8x256xf32, #tpu.memory_space<vmem>>, vector<1x1x8x256xf32>
    %10 = vector.shape_cast %9 : vector<1x1x8x256xf32> to vector<8x256xf32>
    %c0_5 = arith.constant 0 : index
    %c0_6 = arith.constant 0 : index
    %c0_7 = arith.constant 0 : index
    %11 = vector.load %arg4[%c0_5, %c0_6, %c0_7] : memref<1x8x256xf32, #tpu.memory_space<vmem>>, vector<1x8x256xf32>
    %12 = vector.shape_cast %11 : vector<1x8x256xf32> to vector<8x256xf32>
    %c0_8 = arith.constant 0 : index
    %c0_9 = arith.constant 0 : index
    %c0_10 = arith.constant 0 : index
    %13 = vector.load %arg5[%c0_8, %c0_9, %c0_10] : memref<1x8x256xf32, #tpu.memory_space<vmem>>, vector<1x8x256xf32>
    %14 = vector.shape_cast %13 : vector<1x8x256xf32> to vector<8x256xf32>
    %15 = vector.broadcast %2 : vector<8x1xf32> to vector<8x256xf32>
    %16 = arith.mulf %14, %15 : vector<8x256xf32>
    %c0_11 = arith.constant 0 : index
    %c0_12 = arith.constant 0 : index
    %c0_13 = arith.constant 0 : index
    %17 = vector.load %arg6[%c0_11, %c0_12, %c0_13] : memref<1x8x256xf32, #tpu.memory_space<vmem>>, vector<1x8x256xf32>
    %18 = vector.shape_cast %17 : vector<1x8x256xf32> to vector<8x256xf32>
    %19 = vector.broadcast %3 : vector<8x1xf32> to vector<8x256xf32>
    %20 = arith.mulf %18, %19 : vector<8x256xf32>
    %21 = arith.maximumf %16, %20 : vector<8x256xf32>
    %c0_14 = arith.constant 0 : index
    %c0_15 = arith.constant 0 : index
    %c0_16 = arith.constant 0 : index
    %22 = vector.load %arg7[%c0_14, %c0_15, %c0_16] : memref<1x8x256xf32, #tpu.memory_space<vmem>>, vector<1x8x256xf32>
    %23 = vector.shape_cast %22 : vector<1x8x256xf32> to vector<8x256xf32>
    %24 = vector.broadcast %4 : vector<8x1xf32> to vector<8x256xf32>
    %25 = arith.mulf %23, %24 : vector<8x256xf32>
    %c0_17 = arith.constant 0 : index
    %c0_18 = arith.constant 0 : index
    %c0_19 = arith.constant 0 : index
    %26 = vector.load %arg8[%c0_17, %c0_18, %c0_19] : memref<1x8x256xf32, #tpu.memory_space<vmem>>, vector<1x8x256xf32>
    %27 = vector.shape_cast %26 : vector<1x8x256xf32> to vector<8x256xf32>
    %28 = vector.broadcast %5 : vector<8x1xf32> to vector<8x256xf32>
    %29 = arith.mulf %27, %28 : vector<8x256xf32>
    %30 = arith.maximumf %25, %29 : vector<8x256xf32>
    %cst = arith.constant 3.000000e-01 : f32
    %cst_20 = arith.constant 1.000000e+00 : f32
    %31 = vector.broadcast %cst : f32 to vector<8x256xf32>
    %32 = arith.maximumf %31, %10 : vector<8x256xf32>
    %33 = vector.broadcast %cst_20 : f32 to vector<8x256xf32>
    %34 = arith.minimumf %33, %32 : vector<8x256xf32>
    %cst_21 = arith.constant 3.000000e-01 : f32
    %35 = vector.broadcast %cst_21 : f32 to vector<8x256xf32>
    %36 = arith.subf %34, %35 : vector<8x256xf32>
    %cst_22 = arith.constant 1.42857146 : f32
    %37 = vector.broadcast %cst_22 : f32 to vector<8x256xf32>
    %38 = arith.mulf %36, %37 : vector<8x256xf32>
    %cst_23 = arith.constant 3.000000e-01 : f32
    %cst_24 = arith.constant 1.000000e+00 : f32
    %39 = vector.broadcast %cst_23 : f32 to vector<8x256xf32>
    %40 = arith.maximumf %39, %12 : vector<8x256xf32>
    %41 = vector.broadcast %cst_24 : f32 to vector<8x256xf32>
    %42 = arith.minimumf %41, %40 : vector<8x256xf32>
    %cst_25 = arith.constant 3.000000e-01 : f32
    %43 = vector.broadcast %cst_25 : f32 to vector<8x256xf32>
    %44 = arith.subf %42, %43 : vector<8x256xf32>
    %cst_26 = arith.constant 1.42857146 : f32
    %45 = vector.broadcast %cst_26 : f32 to vector<8x256xf32>
    %46 = arith.mulf %44, %45 : vector<8x256xf32>
    %cst_27 = arith.constant 1.000000e+00 : f32
    %47 = vector.broadcast %cst_27 : f32 to vector<8x256xf32>
    %48 = arith.subf %47, %38 : vector<8x256xf32>
    %49 = arith.mulf %46, %48 : vector<8x256xf32>
    %50 = vector.broadcast %6 : vector<8x1xf32> to vector<8x256xf32>
    %51 = arith.mulf %30, %50 : vector<8x256xf32>
    %cst_28 = arith.constant 1.000000e+00 : f32
    %52 = vector.broadcast %cst_28 : f32 to vector<8x256xf32>
    %53 = arith.subf %52, %51 : vector<8x256xf32>
    %54 = vector.broadcast %7 : vector<8x1xf32> to vector<8x256xf32>
    %55 = arith.mulf %54, %53 : vector<8x256xf32>
    %cst_29 = arith.constant 1.000000e+00 : f32
    %56 = vector.broadcast %cst_29 : f32 to vector<8x256xf32>
    %57 = arith.subf %56, %49 : vector<8x256xf32>
    %58 = arith.mulf %55, %57 : vector<8x256xf32>
    %59 = vector.broadcast %7 : vector<8x1xf32> to vector<8x256xf32>
    %60 = arith.mulf %59, %49 : vector<8x256xf32>
    %61 = arith.mulf %60, %46 : vector<8x256xf32>
    %62 = vector.broadcast %7 : vector<8x1xf32> to vector<8x256xf32>
    %63 = arith.mulf %62, %21 : vector<8x256xf32>
    %64 = vector.broadcast %8 : vector<8x1xf32> to vector<8x256xf32>
    %65 = arith.addf %63, %64 : vector<8x256xf32>
    %c0_30 = arith.constant 0 : index
    %c0_31 = arith.constant 0 : index
    %c0_32 = arith.constant 0 : index
    %c0_33 = arith.constant 0 : index
    %66 = vector.load %arg2[%c0_30, %c0_31, %c0_32, %c0_33] : memref<1x16x8x256xf32, #tpu.memory_space<vmem>>, vector<1x1x8x256xf32>
    %67 = vector.shape_cast %66 : vector<1x1x8x256xf32> to vector<8x256xf32>
    %68 = arith.mulf %67, %58 : vector<8x256xf32>
    %c0_34 = arith.constant 0 : index
    %c0_35 = arith.constant 0 : index
    %c0_36 = arith.constant 0 : index
    %c0_37 = arith.constant 0 : index
    %69 = vector.load %arg3[%c0_34, %c0_35, %c0_36, %c0_37] : memref<1x13x8x256xf32, #tpu.memory_space<vmem>>, vector<1x1x8x256xf32>
    %70 = vector.shape_cast %69 : vector<1x1x8x256xf32> to vector<8x256xf32>
    %71 = arith.mulf %70, %61 : vector<8x256xf32>
    %72 = arith.addf %68, %71 : vector<8x256xf32>
    %73 = arith.addf %72, %65 : vector<8x256xf32>
    %c0_38 = arith.constant 0 : index
    %c0_39 = arith.constant 0 : index
    %c0_40 = arith.constant 0 : index
    %c0_41 = arith.constant 0 : index
    %74 = vector.load %arg10[%c0_38, %c0_39, %c0_40, %c0_41] : memref<1x16x8x256xf32, #tpu.memory_space<vmem>>, vector<1x1x8x256xf32>
    %75 = vector.shape_cast %74 : vector<1x1x8x256xf32> to vector<8x256xf32>
    %76 = vector.shape_cast %73 : vector<8x256xf32> to vector<1x1x8x256xf32>
    tpu.vector_store %arg10[%c0_38, %c0_39, %c0_40, %c0_41], %76 {strides = array<i32>} : memref<1x16x8x256xf32, #tpu.memory_space<vmem>>, vector<1x1x8x256xf32>,
    %c0_42 = arith.constant 0 : index
    %c1 = arith.constant 1 : index
    %c0_43 = arith.constant 0 : index
    %c0_44 = arith.constant 0 : index
    %77 = vector.load %arg2[%c0_42, %c1, %c0_43, %c0_44] : memref<1x16x8x256xf32, #tpu.memory_space<vmem>>, vector<1x1x8x256xf32>
    %78 = vector.shape_cast %77 : vector<1x1x8x256xf32> to vector<8x256xf32>
    %79 = arith.mulf %78, %58 : vector<8x256xf32>
    %c0_45 = arith.constant 0 : index
    %c1_46 = arith.constant 1 : index
    %c0_47 = arith.constant 0 : index
    %c0_48 = arith.constant 0 : index
    %80 = vector.load %arg3[%c0_45, %c1_46, %c0_47, %c0_48] : memref<1x13x8x256xf32, #tpu.memory_space<vmem>>, vector<1x1x8x256xf32>
    %81 = vector.shape_cast %80 : vector<1x1x8x256xf32> to vector<8x256xf32>
    %82 = arith.mulf %81, %61 : vector<8x256xf32>
    %83 = arith.addf %79, %82 : vector<8x256xf32>
    %84 = arith.addf %83, %65 : vector<8x256xf32>
    %c0_49 = arith.constant 0 : index
    %c1_50 = arith.constant 1 : index
    %c0_51 = arith.constant 0 : index
    %c0_52 = arith.constant 0 : index
    %85 = vector.load %arg10[%c0_49, %c1_50, %c0_51, %c0_52] : memref<1x16x8x256xf32, #tpu.memory_space<vmem>>, vector<1x1x8x256xf32>
    %86 = vector.shape_cast %85 : vector<1x1x8x256xf32> to vector<8x256xf32>
    %87 = vector.shape_cast %84 : vector<8x256xf32> to vector<1x1x8x256xf32>
    tpu.vector_store %arg10[%c0_49, %c1_50, %c0_51, %c0_52], %87 {strides = array<i32>} : memref<1x16x8x256xf32, #tpu.memory_space<vmem>>, vector<1x1x8x256xf32>,
    %c0_53 = arith.constant 0 : index
    %c2 = arith.constant 2 : index
    %c0_54 = arith.constant 0 : index
    %c0_55 = arith.constant 0 : index
    %88 = vector.load %arg2[%c0_53, %c2, %c0_54, %c0_55] : memref<1x16x8x256xf32, #tpu.memory_space<vmem>>, vector<1x1x8x256xf32>
    %89 = vector.shape_cast %88 : vector<1x1x8x256xf32> to vector<8x256xf32>
    %90 = arith.mulf %89, %58 : vector<8x256xf32>
    %c0_56 = arith.constant 0 : index
    %c2_57 = arith.constant 2 : index
    %c0_58 = arith.constant 0 : index
    %c0_59 = arith.constant 0 : index
    %91 = vector.load %arg3[%c0_56, %c2_57, %c0_58, %c0_59] : memref<1x13x8x256xf32, #tpu.memory_space<vmem>>, vector<1x1x8x256xf32>
    %92 = vector.shape_cast %91 : vector<1x1x8x256xf32> to vector<8x256xf32>
    %93 = arith.mulf %92, %61 : vector<8x256xf32>
    %94 = arith.addf %90, %93 : vector<8x256xf32>
    %95 = arith.addf %94, %65 : vector<8x256xf32>
    %c0_60 = arith.constant 0 : index
    %c2_61 = arith.constant 2 : index
    %c0_62 = arith.constant 0 : index
    %c0_63 = arith.constant 0 : index
    %96 = vector.load %arg10[%c0_60, %c2_61, %c0_62, %c0_63] : memref<1x16x8x256xf32, #tpu.memory_space<vmem>>, vector<1x1x8x256xf32>
    %97 = vector.shape_cast %96 : vector<1x1x8x256xf32> to vector<8x256xf32>
    %98 = vector.shape_cast %95 : vector<8x256xf32> to vector<1x1x8x256xf32>
    tpu.vector_store %arg10[%c0_60, %c2_61, %c0_62, %c0_63], %98 {strides = array<i32>} : memref<1x16x8x256xf32, #tpu.memory_space<vmem>>, vector<1x1x8x256xf32>,
    %c0_64 = arith.constant 0 : index
    %c3 = arith.constant 3 : index
    %c0_65 = arith.constant 0 : index
    %c0_66 = arith.constant 0 : index
    %99 = vector.load %arg2[%c0_64, %c3, %c0_65, %c0_66] : memref<1x16x8x256xf32, #tpu.memory_space<vmem>>, vector<1x1x8x256xf32>
    %100 = vector.shape_cast %99 : vector<1x1x8x256xf32> to vector<8x256xf32>
    %101 = arith.mulf %100, %58 : vector<8x256xf32>
    %c0_67 = arith.constant 0 : index
    %c3_68 = arith.constant 3 : index
    %c0_69 = arith.constant 0 : index
    %c0_70 = arith.constant 0 : index
    %102 = vector.load %arg3[%c0_67, %c3_68, %c0_69, %c0_70] : memref<1x13x8x256xf32, #tpu.memory_space<vmem>>, vector<1x1x8x256xf32>
    %103 = vector.shape_cast %102 : vector<1x1x8x256xf32> to vector<8x256xf32>
    %104 = arith.mulf %103, %61 : vector<8x256xf32>
    %105 = arith.addf %101, %104 : vector<8x256xf32>
    %106 = arith.addf %105, %65 : vector<8x256xf32>
    %c0_71 = arith.constant 0 : index
    %c3_72 = arith.constant 3 : index
    %c0_73 = arith.constant 0 : index
    %c0_74 = arith.constant 0 : index
    %107 = vector.load %arg10[%c0_71, %c3_72, %c0_73, %c0_74] : memref<1x16x8x256xf32, #tpu.memory_space<vmem>>, vector<1x1x8x256xf32>
    %108 = vector.shape_cast %107 : vector<1x1x8x256xf32> to vector<8x256xf32>
    %109 = vector.shape_cast %106 : vector<8x256xf32> to vector<1x1x8x256xf32>
    tpu.vector_store %arg10[%c0_71, %c3_72, %c0_73, %c0_74], %109 {strides = array<i32>} : memref<1x16x8x256xf32, #tpu.memory_space<vmem>>, vector<1x1x8x256xf32>,
    %c0_75 = arith.constant 0 : index
    %c4 = arith.constant 4 : index
    %c0_76 = arith.constant 0 : index
    %c0_77 = arith.constant 0 : index
    %110 = vector.load %arg2[%c0_75, %c4, %c0_76, %c0_77] : memref<1x16x8x256xf32, #tpu.memory_space<vmem>>, vector<1x1x8x256xf32>
    %111 = vector.shape_cast %110 : vector<1x1x8x256xf32> to vector<8x256xf32>
    %112 = arith.mulf %111, %58 : vector<8x256xf32>
    %c0_78 = arith.constant 0 : index
    %c4_79 = arith.constant 4 : index
    %c0_80 = arith.constant 0 : index
    %c0_81 = arith.constant 0 : index
    %113 = vector.load %arg3[%c0_78, %c4_79, %c0_80, %c0_81] : memref<1x13x8x256xf32, #tpu.memory_space<vmem>>, vector<1x1x8x256xf32>
    %114 = vector.shape_cast %113 : vector<1x1x8x256xf32> to vector<8x256xf32>
    %115 = arith.mulf %114, %61 : vector<8x256xf32>
    %116 = arith.addf %112, %115 : vector<8x256xf32>
    %117 = arith.addf %116, %65 : vector<8x256xf32>
    %c0_82 = arith.constant 0 : index
    %c4_83 = arith.constant 4 : index
    %c0_84 = arith.constant 0 : index
    %c0_85 = arith.constant 0 : index
    %118 = vector.load %arg10[%c0_82, %c4_83, %c0_84, %c0_85] : memref<1x16x8x256xf32, #tpu.memory_space<vmem>>, vector<1x1x8x256xf32>
    %119 = vector.shape_cast %118 : vector<1x1x8x256xf32> to vector<8x256xf32>
    %120 = vector.shape_cast %117 : vector<8x256xf32> to vector<1x1x8x256xf32>
    tpu.vector_store %arg10[%c0_82, %c4_83, %c0_84, %c0_85], %120 {strides = array<i32>} : memref<1x16x8x256xf32, #tpu.memory_space<vmem>>, vector<1x1x8x256xf32>,
    %c0_86 = arith.constant 0 : index
    %c5 = arith.constant 5 : index
    %c0_87 = arith.constant 0 : index
    %c0_88 = arith.constant 0 : index
    %121 = vector.load %arg2[%c0_86, %c5, %c0_87, %c0_88] : memref<1x16x8x256xf32, #tpu.memory_space<vmem>>, vector<1x1x8x256xf32>
    %122 = vector.shape_cast %121 : vector<1x1x8x256xf32> to vector<8x256xf32>
    %123 = arith.mulf %122, %58 : vector<8x256xf32>
    %c0_89 = arith.constant 0 : index
    %c5_90 = arith.constant 5 : index
    %c0_91 = arith.constant 0 : index
    %c0_92 = arith.constant 0 : index
    %124 = vector.load %arg3[%c0_89, %c5_90, %c0_91, %c0_92] : memref<1x13x8x256xf32, #tpu.memory_space<vmem>>, vector<1x1x8x256xf32>
    %125 = vector.shape_cast %124 : vector<1x1x8x256xf32> to vector<8x256xf32>
    %126 = arith.mulf %125, %61 : vector<8x256xf32>
    %127 = arith.addf %123, %126 : vector<8x256xf32>
    %128 = arith.addf %127, %65 : vector<8x256xf32>
    %c0_93 = arith.constant 0 : index
    %c5_94 = arith.constant 5 : index
    %c0_95 = arith.constant 0 : index
    %c0_96 = arith.constant 0 : index
    %129 = vector.load %arg10[%c0_93, %c5_94, %c0_95, %c0_96] : memref<1x16x8x256xf32, #tpu.memory_space<vmem>>, vector<1x1x8x256xf32>
    %130 = vector.shape_cast %129 : vector<1x1x8x256xf32> to vector<8x256xf32>
    %131 = vector.shape_cast %128 : vector<8x256xf32> to vector<1x1x8x256xf32>
    tpu.vector_store %arg10[%c0_93, %c5_94, %c0_95, %c0_96], %131 {strides = array<i32>} : memref<1x16x8x256xf32, #tpu.memory_space<vmem>>, vector<1x1x8x256xf32>,
    %c0_97 = arith.constant 0 : index
    %c6 = arith.constant 6 : index
    %c0_98 = arith.constant 0 : index
    %c0_99 = arith.constant 0 : index
    %132 = vector.load %arg2[%c0_97, %c6, %c0_98, %c0_99] : memref<1x16x8x256xf32, #tpu.memory_space<vmem>>, vector<1x1x8x256xf32>
    %133 = vector.shape_cast %132 : vector<1x1x8x256xf32> to vector<8x256xf32>
    %134 = arith.mulf %133, %58 : vector<8x256xf32>
    %c0_100 = arith.constant 0 : index
    %c6_101 = arith.constant 6 : index
    %c0_102 = arith.constant 0 : index
    %c0_103 = arith.constant 0 : index
    %135 = vector.load %arg3[%c0_100, %c6_101, %c0_102, %c0_103] : memref<1x13x8x256xf32, #tpu.memory_space<vmem>>, vector<1x1x8x256xf32>
    %136 = vector.shape_cast %135 : vector<1x1x8x256xf32> to vector<8x256xf32>
    %137 = arith.mulf %136, %61 : vector<8x256xf32>
    %138 = arith.addf %134, %137 : vector<8x256xf32>
    %139 = arith.addf %138, %65 : vector<8x256xf32>
    %c0_104 = arith.constant 0 : index
    %c6_105 = arith.constant 6 : index
    %c0_106 = arith.constant 0 : index
    %c0_107 = arith.constant 0 : index
    %140 = vector.load %arg10[%c0_104, %c6_105, %c0_106, %c0_107] : memref<1x16x8x256xf32, #tpu.memory_space<vmem>>, vector<1x1x8x256xf32>
    %141 = vector.shape_cast %140 : vector<1x1x8x256xf32> to vector<8x256xf32>
    %142 = vector.shape_cast %139 : vector<8x256xf32> to vector<1x1x8x256xf32>
    tpu.vector_store %arg10[%c0_104, %c6_105, %c0_106, %c0_107], %142 {strides = array<i32>} : memref<1x16x8x256xf32, #tpu.memory_space<vmem>>, vector<1x1x8x256xf32>,
    %c0_108 = arith.constant 0 : index
    %c7 = arith.constant 7 : index
    %c0_109 = arith.constant 0 : index
    %c0_110 = arith.constant 0 : index
    %143 = vector.load %arg2[%c0_108, %c7, %c0_109, %c0_110] : memref<1x16x8x256xf32, #tpu.memory_space<vmem>>, vector<1x1x8x256xf32>
    %144 = vector.shape_cast %143 : vector<1x1x8x256xf32> to vector<8x256xf32>
    %145 = arith.mulf %144, %58 : vector<8x256xf32>
    %c0_111 = arith.constant 0 : index
    %c7_112 = arith.constant 7 : index
    %c0_113 = arith.constant 0 : index
    %c0_114 = arith.constant 0 : index
    %146 = vector.load %arg3[%c0_111, %c7_112, %c0_113, %c0_114] : memref<1x13x8x256xf32, #tpu.memory_space<vmem>>, vector<1x1x8x256xf32>
    %147 = vector.shape_cast %146 : vector<1x1x8x256xf32> to vector<8x256xf32>
    %148 = arith.mulf %147, %61 : vector<8x256xf32>
    %149 = arith.addf %145, %148 : vector<8x256xf32>
    %150 = arith.addf %149, %65 : vector<8x256xf32>
    %c0_115 = arith.constant 0 : index
    %c7_116 = arith.constant 7 : index
    %c0_117 = arith.constant 0 : index
    %c0_118 = arith.constant 0 : index
    %151 = vector.load %arg10[%c0_115, %c7_116, %c0_117, %c0_118] : memref<1x16x8x256xf32, #tpu.memory_space<vmem>>, vector<1x1x8x256xf32>
    %152 = vector.shape_cast %151 : vector<1x1x8x256xf32> to vector<8x256xf32>
    %153 = vector.shape_cast %150 : vector<8x256xf32> to vector<1x1x8x256xf32>
    tpu.vector_store %arg10[%c0_115, %c7_116, %c0_117, %c0_118], %153 {strides = array<i32>} : memref<1x16x8x256xf32, #tpu.memory_space<vmem>>, vector<1x1x8x256xf32>,
    %c0_119 = arith.constant 0 : index
    %c8 = arith.constant 8 : index
    %c0_120 = arith.constant 0 : index
    %c0_121 = arith.constant 0 : index
    %154 = vector.load %arg2[%c0_119, %c8, %c0_120, %c0_121] : memref<1x16x8x256xf32, #tpu.memory_space<vmem>>, vector<1x1x8x256xf32>
    %155 = vector.shape_cast %154 : vector<1x1x8x256xf32> to vector<8x256xf32>
    %156 = arith.mulf %155, %58 : vector<8x256xf32>
    %c0_122 = arith.constant 0 : index
    %c8_123 = arith.constant 8 : index
    %c0_124 = arith.constant 0 : index
    %c0_125 = arith.constant 0 : index
    %157 = vector.load %arg3[%c0_122, %c8_123, %c0_124, %c0_125] : memref<1x13x8x256xf32, #tpu.memory_space<vmem>>, vector<1x1x8x256xf32>
    %158 = vector.shape_cast %157 : vector<1x1x8x256xf32> to vector<8x256xf32>
    %159 = arith.mulf %158, %61 : vector<8x256xf32>
    %160 = arith.addf %156, %159 : vector<8x256xf32>
    %161 = arith.addf %160, %65 : vector<8x256xf32>
    %c0_126 = arith.constant 0 : index
    %c8_127 = arith.constant 8 : index
    %c0_128 = arith.constant 0 : index
    %c0_129 = arith.constant 0 : index
    %162 = vector.load %arg10[%c0_126, %c8_127, %c0_128, %c0_129] : memref<1x16x8x256xf32, #tpu.memory_space<vmem>>, vector<1x1x8x256xf32>
    %163 = vector.shape_cast %162 : vector<1x1x8x256xf32> to vector<8x256xf32>
    %164 = vector.shape_cast %161 : vector<8x256xf32> to vector<1x1x8x256xf32>
    tpu.vector_store %arg10[%c0_126, %c8_127, %c0_128, %c0_129], %164 {strides = array<i32>} : memref<1x16x8x256xf32, #tpu.memory_space<vmem>>, vector<1x1x8x256xf32>,
    %c0_130 = arith.constant 0 : index
    %c9 = arith.constant 9 : index
    %c0_131 = arith.constant 0 : index
    %c0_132 = arith.constant 0 : index
    %165 = vector.load %arg2[%c0_130, %c9, %c0_131, %c0_132] : memref<1x16x8x256xf32, #tpu.memory_space<vmem>>, vector<1x1x8x256xf32>
    %166 = vector.shape_cast %165 : vector<1x1x8x256xf32> to vector<8x256xf32>
    %167 = arith.mulf %166, %58 : vector<8x256xf32>
    %c0_133 = arith.constant 0 : index
    %c9_134 = arith.constant 9 : index
    %c0_135 = arith.constant 0 : index
    %c0_136 = arith.constant 0 : index
    %168 = vector.load %arg3[%c0_133, %c9_134, %c0_135, %c0_136] : memref<1x13x8x256xf32, #tpu.memory_space<vmem>>, vector<1x1x8x256xf32>
    %169 = vector.shape_cast %168 : vector<1x1x8x256xf32> to vector<8x256xf32>
    %170 = arith.mulf %169, %61 : vector<8x256xf32>
    %171 = arith.addf %167, %170 : vector<8x256xf32>
    %172 = arith.addf %171, %65 : vector<8x256xf32>
    %c0_137 = arith.constant 0 : index
    %c9_138 = arith.constant 9 : index
    %c0_139 = arith.constant 0 : index
    %c0_140 = arith.constant 0 : index
    %173 = vector.load %arg10[%c0_137, %c9_138, %c0_139, %c0_140] : memref<1x16x8x256xf32, #tpu.memory_space<vmem>>, vector<1x1x8x256xf32>
    %174 = vector.shape_cast %173 : vector<1x1x8x256xf32> to vector<8x256xf32>
    %175 = vector.shape_cast %172 : vector<8x256xf32> to vector<1x1x8x256xf32>
    tpu.vector_store %arg10[%c0_137, %c9_138, %c0_139, %c0_140], %175 {strides = array<i32>} : memref<1x16x8x256xf32, #tpu.memory_space<vmem>>, vector<1x1x8x256xf32>,
    %c0_141 = arith.constant 0 : index
    %c10 = arith.constant 10 : index
    %c0_142 = arith.constant 0 : index
    %c0_143 = arith.constant 0 : index
    %176 = vector.load %arg2[%c0_141, %c10, %c0_142, %c0_143] : memref<1x16x8x256xf32, #tpu.memory_space<vmem>>, vector<1x1x8x256xf32>
    %177 = vector.shape_cast %176 : vector<1x1x8x256xf32> to vector<8x256xf32>
    %178 = arith.mulf %177, %58 : vector<8x256xf32>
    %c0_144 = arith.constant 0 : index
    %c10_145 = arith.constant 10 : index
    %c0_146 = arith.constant 0 : index
    %c0_147 = arith.constant 0 : index
    %179 = vector.load %arg3[%c0_144, %c10_145, %c0_146, %c0_147] : memref<1x13x8x256xf32, #tpu.memory_space<vmem>>, vector<1x1x8x256xf32>
    %180 = vector.shape_cast %179 : vector<1x1x8x256xf32> to vector<8x256xf32>
    %181 = arith.mulf %180, %61 : vector<8x256xf32>
    %182 = arith.addf %178, %181 : vector<8x256xf32>
    %183 = arith.addf %182, %65 : vector<8x256xf32>
    %c0_148 = arith.constant 0 : index
    %c10_149 = arith.constant 10 : index
    %c0_150 = arith.constant 0 : index
    %c0_151 = arith.constant 0 : index
    %184 = vector.load %arg10[%c0_148, %c10_149, %c0_150, %c0_151] : memref<1x16x8x256xf32, #tpu.memory_space<vmem>>, vector<1x1x8x256xf32>
    %185 = vector.shape_cast %184 : vector<1x1x8x256xf32> to vector<8x256xf32>
    %186 = vector.shape_cast %183 : vector<8x256xf32> to vector<1x1x8x256xf32>
    tpu.vector_store %arg10[%c0_148, %c10_149, %c0_150, %c0_151], %186 {strides = array<i32>} : memref<1x16x8x256xf32, #tpu.memory_space<vmem>>, vector<1x1x8x256xf32>,
    %c0_152 = arith.constant 0 : index
    %c11 = arith.constant 11 : index
    %c0_153 = arith.constant 0 : index
    %c0_154 = arith.constant 0 : index
    %187 = vector.load %arg2[%c0_152, %c11, %c0_153, %c0_154] : memref<1x16x8x256xf32, #tpu.memory_space<vmem>>, vector<1x1x8x256xf32>
    %188 = vector.shape_cast %187 : vector<1x1x8x256xf32> to vector<8x256xf32>
    %189 = arith.mulf %188, %58 : vector<8x256xf32>
    %c0_155 = arith.constant 0 : index
    %c11_156 = arith.constant 11 : index
    %c0_157 = arith.constant 0 : index
    %c0_158 = arith.constant 0 : index
    %190 = vector.load %arg3[%c0_155, %c11_156, %c0_157, %c0_158] : memref<1x13x8x256xf32, #tpu.memory_space<vmem>>, vector<1x1x8x256xf32>
    %191 = vector.shape_cast %190 : vector<1x1x8x256xf32> to vector<8x256xf32>
    %192 = arith.mulf %191, %61 : vector<8x256xf32>
    %193 = arith.addf %189, %192 : vector<8x256xf32>
    %194 = arith.addf %193, %65 : vector<8x256xf32>
    %c0_159 = arith.constant 0 : index
    %c11_160 = arith.constant 11 : index
    %c0_161 = arith.constant 0 : index
    %c0_162 = arith.constant 0 : index
    %195 = vector.load %arg10[%c0_159, %c11_160, %c0_161, %c0_162] : memref<1x16x8x256xf32, #tpu.memory_space<vmem>>, vector<1x1x8x256xf32>
    %196 = vector.shape_cast %195 : vector<1x1x8x256xf32> to vector<8x256xf32>
    %197 = vector.shape_cast %194 : vector<8x256xf32> to vector<1x1x8x256xf32>
    tpu.vector_store %arg10[%c0_159, %c11_160, %c0_161, %c0_162], %197 {strides = array<i32>} : memref<1x16x8x256xf32, #tpu.memory_space<vmem>>, vector<1x1x8x256xf32>,
    %c0_163 = arith.constant 0 : index
    %c12 = arith.constant 12 : index
    %c0_164 = arith.constant 0 : index
    %c0_165 = arith.constant 0 : index
    %198 = vector.load %arg2[%c0_163, %c12, %c0_164, %c0_165] : memref<1x16x8x256xf32, #tpu.memory_space<vmem>>, vector<1x1x8x256xf32>
    %199 = vector.shape_cast %198 : vector<1x1x8x256xf32> to vector<8x256xf32>
    %200 = arith.mulf %199, %58 : vector<8x256xf32>
    %c0_166 = arith.constant 0 : index
    %c12_167 = arith.constant 12 : index
    %c0_168 = arith.constant 0 : index
    %c0_169 = arith.constant 0 : index
    %201 = vector.load %arg3[%c0_166, %c12_167, %c0_168, %c0_169] : memref<1x13x8x256xf32, #tpu.memory_space<vmem>>, vector<1x1x8x256xf32>
    %202 = vector.shape_cast %201 : vector<1x1x8x256xf32> to vector<8x256xf32>
    %203 = arith.mulf %202, %61 : vector<8x256xf32>
    %204 = arith.addf %200, %203 : vector<8x256xf32>
    %205 = arith.addf %204, %65 : vector<8x256xf32>
    %c0_170 = arith.constant 0 : index
    %c12_171 = arith.constant 12 : index
    %c0_172 = arith.constant 0 : index
    %c0_173 = arith.constant 0 : index
    %206 = vector.load %arg10[%c0_170, %c12_171, %c0_172, %c0_173] : memref<1x16x8x256xf32, #tpu.memory_space<vmem>>, vector<1x1x8x256xf32>
    %207 = vector.shape_cast %206 : vector<1x1x8x256xf32> to vector<8x256xf32>
    %208 = vector.shape_cast %205 : vector<8x256xf32> to vector<1x1x8x256xf32>
    tpu.vector_store %arg10[%c0_170, %c12_171, %c0_172, %c0_173], %208 {strides = array<i32>} : memref<1x16x8x256xf32, #tpu.memory_space<vmem>>, vector<1x1x8x256xf32>,
    %c0_174 = arith.constant 0 : index
    %c13 = arith.constant 13 : index
    %c0_175 = arith.constant 0 : index
    %c0_176 = arith.constant 0 : index
    %209 = vector.load %arg2[%c0_174, %c13, %c0_175, %c0_176] : memref<1x16x8x256xf32, #tpu.memory_space<vmem>>, vector<1x1x8x256xf32>
    %210 = vector.shape_cast %209 : vector<1x1x8x256xf32> to vector<8x256xf32>
    %c0_177 = arith.constant 0 : index
    %c13_178 = arith.constant 13 : index
    %c0_179 = arith.constant 0 : index
    %c0_180 = arith.constant 0 : index
    %211 = vector.load %arg10[%c0_177, %c13_178, %c0_179, %c0_180] : memref<1x16x8x256xf32, #tpu.memory_space<vmem>>, vector<1x1x8x256xf32>
    %212 = vector.shape_cast %211 : vector<1x1x8x256xf32> to vector<8x256xf32>
    %213 = vector.shape_cast %210 : vector<8x256xf32> to vector<1x1x8x256xf32>
    tpu.vector_store %arg10[%c0_177, %c13_178, %c0_179, %c0_180], %213 {strides = array<i32>} : memref<1x16x8x256xf32, #tpu.memory_space<vmem>>, vector<1x1x8x256xf32>,
    %c0_181 = arith.constant 0 : index
    %c14 = arith.constant 14 : index
    %c0_182 = arith.constant 0 : index
    %c0_183 = arith.constant 0 : index
    %214 = vector.load %arg2[%c0_181, %c14, %c0_182, %c0_183] : memref<1x16x8x256xf32, #tpu.memory_space<vmem>>, vector<1x1x8x256xf32>
    %215 = vector.shape_cast %214 : vector<1x1x8x256xf32> to vector<8x256xf32>
    %c0_184 = arith.constant 0 : index
    %c14_185 = arith.constant 14 : index
    %c0_186 = arith.constant 0 : index
    %c0_187 = arith.constant 0 : index
    %216 = vector.load %arg10[%c0_184, %c14_185, %c0_186, %c0_187] : memref<1x16x8x256xf32, #tpu.memory_space<vmem>>, vector<1x1x8x256xf32>
    %217 = vector.shape_cast %216 : vector<1x1x8x256xf32> to vector<8x256xf32>
    %218 = vector.shape_cast %215 : vector<8x256xf32> to vector<1x1x8x256xf32>
    tpu.vector_store %arg10[%c0_184, %c14_185, %c0_186, %c0_187], %218 {strides = array<i32>} : memref<1x16x8x256xf32, #tpu.memory_space<vmem>>, vector<1x1x8x256xf32>,
    %c0_188 = arith.constant 0 : index
    %c15_189 = arith.constant 15 : index
    %c0_190 = arith.constant 0 : index
    %c0_191 = arith.constant 0 : index
    %219 = vector.load %arg2[%c0_188, %c15_189, %c0_190, %c0_191] : memref<1x16x8x256xf32, #tpu.memory_space<vmem>>, vector<1x1x8x256xf32>
    %220 = vector.shape_cast %219 : vector<1x1x8x256xf32> to vector<8x256xf32>
    %c0_192 = arith.constant 0 : index
    %c15_193 = arith.constant 15 : index
    %c0_194 = arith.constant 0 : index
    %c0_195 = arith.constant 0 : index
    %221 = vector.load %arg10[%c0_192, %c15_193, %c0_194, %c0_195] : memref<1x16x8x256xf32, #tpu.memory_space<vmem>>, vector<1x1x8x256xf32>
    %222 = vector.shape_cast %221 : vector<1x1x8x256xf32> to vector<8x256xf32>
    %223 = vector.shape_cast %220 : vector<8x256xf32> to vector<1x1x8x256xf32>
    tpu.vector_store %arg10[%c0_192, %c15_193, %c0_194, %c0_195], %223 {strides = array<i32>} : memref<1x16x8x256xf32, #tpu.memory_space<vmem>>, vector<1x1x8x256xf32>,
    return
  }
  func.func @transform_0(%arg0: i32, %arg1: i32) -> (i32, i32, i32, i32) {
    %c0_i32 = arith.constant 0 : i32
    %c0_i32_0 = arith.constant 0 : i32
    %c0_i32_1 = arith.constant 0 : i32
    return %arg0, %c0_i32, %c0_i32_0, %arg1 : i32, i32, i32, i32
  }
  func.func @transform_1(%arg0: i32, %arg1: i32) -> (i32, i32, i32, i32) {
    %c0_i32 = arith.constant 0 : i32
    %c0_i32_0 = arith.constant 0 : i32
    %c0_i32_1 = arith.constant 0 : i32
    return %arg0, %c0_i32, %c0_i32_0, %arg1 : i32, i32, i32, i32
  }
  func.func @transform_2(%arg0: i32, %arg1: i32) -> (i32, i32, i32) {
    %c0_i32 = arith.constant 0 : i32
    %c0_i32_0 = arith.constant 0 : i32
    return %arg0, %c0_i32, %arg1 : i32, i32, i32
  }
  func.func @transform_3(%arg0: i32, %arg1: i32) -> (i32, i32, i32) {
    %c0_i32 = arith.constant 0 : i32
    %c0_i32_0 = arith.constant 0 : i32
    return %arg0, %c0_i32, %arg1 : i32, i32, i32
  }
  func.func @transform_4(%arg0: i32, %arg1: i32) -> (i32, i32, i32) {
    %c0_i32 = arith.constant 0 : i32
    %c0_i32_0 = arith.constant 0 : i32
    return %arg0, %c0_i32, %arg1 : i32, i32, i32
  }
  func.func @transform_5(%arg0: i32, %arg1: i32) -> (i32, i32, i32) {
    %c0_i32 = arith.constant 0 : i32
    %c0_i32_0 = arith.constant 0 : i32
    return %arg0, %c0_i32, %arg1 : i32, i32, i32
  }
  func.func @transform_6(%arg0: i32, %arg1: i32) -> (i32, i32, i32) {
    %c0_i32 = arith.constant 0 : i32
    %c0_i32_0 = arith.constant 0 : i32
    return %arg0, %c0_i32, %arg1 : i32, i32, i32
  }
  func.func @transform_7(%arg0: i32, %arg1: i32) -> (i32, i32, i32) {
    %c0_i32 = arith.constant 0 : i32
    %c0_i32_0 = arith.constant 0 : i32
    %c0_i32_1 = arith.constant 0 : i32
    return %arg0, %c0_i32, %c0_i32_0 : i32, i32, i32
  }
  func.func @transform_8(%arg0: i32, %arg1: i32) -> (i32, i32, i32, i32) {
    %c0_i32 = arith.constant 0 : i32
    %c0_i32_0 = arith.constant 0 : i32
    %c0_i32_1 = arith.constant 0 : i32
    return %arg0, %c0_i32, %c0_i32_0, %arg1 : i32, i32, i32, i32
  }
}

</mosaic_0001>

<llo_original>
// kernel: tpu_custom_call.1
$region0: #{tpu_custom_call.1}
  #allocation0 [shape = 'u32[]', space=smem, size = 0x4, offset = 0x4, fixed_abs, tag = 'smem constant byte address 0x4 - core index']
  #allocation1 [shape = 'u32[144,128]{1,0:T(1,128)}', space=vmem, size = 0x12000, scoped, tag = 'internal scratch']
  %s0 = inlined_call_operand.hbm [shape: f32[2,16,8,256], index: 0, kind: input, shape index: {}]
  %s1 = inlined_call_operand.hbm [shape: f32[2,13,8,256], index: 1, kind: input, shape index: {}]
  %s2 = inlined_call_operand.vmem [shape: f32[2,8,256], index: 2, kind: input, shape index: {}]
  %s3 = inlined_call_operand.hbm [shape: f32[2,8,256], index: 3, kind: input, shape index: {}]
  %s4 = inlined_call_operand.hbm [shape: f32[2,8,256], index: 4, kind: input, shape index: {}]
  %s5 = inlined_call_operand.hbm [shape: f32[2,8,256], index: 5, kind: input, shape index: {}]
  %s6 = inlined_call_operand.hbm [shape: f32[2,8,256], index: 6, kind: input, shape index: {}]
  %s7 = inlined_call_operand.vmem [shape: f32[2,8,7], index: 7, kind: input, shape index: {}]
  %s8 = inlined_call_operand.hbm [shape: f32[2,16,8,256], index: 8, kind: output, shape index: {}]
  %s9 = sld [smem:[#allocation0]]
  $region89: #{tpu_custom_call.1} parent=0
    _
  %s11 = ssub.s32 1, %s9
  %s12 = scalar_select 0, %s11, %s9
  $region1: #{tpu_custom_call.1} parent=0
    #allocation2 [shape = 'u8[262144]{0}', space=vmem, size = 0x40000, scoped, tag = 'input window, operand 0']
    #allocation3 [shape = 's32[2]{0}', space=sflag, size = 0x8, scoped, tag = 'scoped memory for tpu_custom_call.1']
    #allocation4 [shape = 's32[2]{0}', space=sflag, size = 0x8, scoped, tag = 'scoped memory for tpu_custom_call.1']
    #allocation5 [shape = 'u8[212992]{0}', space=vmem, size = 0x34000, scoped, tag = 'input window, operand 1']
    #allocation6 [shape = 's32[2]{0}', space=sflag, size = 0x8, scoped, tag = 'scoped memory for tpu_custom_call.1']
    #allocation7 [shape = 'u8[16384]{0}', space=vmem, size = 0x4000, scoped, tag = 'input window, operand 3']
    #allocation8 [shape = 'u8[16384]{0}', space=vmem, size = 0x4000, scoped, tag = 'input window, operand 4']
    #allocation9 [shape = 's32[2]{0}', space=sflag, size = 0x8, scoped, tag = 'scoped memory for tpu_custom_call.1']
    #allocation10 [shape = 'u8[16384]{0}', space=vmem, size = 0x4000, scoped, tag = 'input window, operand 5']
    #allocation11 [shape = 'u8[16384]{0}', space=vmem, size = 0x4000, scoped, tag = 'input window, operand 6']
    #allocation12 [shape = 's32[2]{0}', space=sflag, size = 0x8, scoped, tag = 'scoped memory for tpu_custom_call.1']
    #allocation13 [shape = 'u8[262144]{0}', space=vmem, size = 0x40000, scoped, tag = 'output window, operand 0']
    %13 = vsyncpa [#allocation3], 0
    %s14 = scalar_lea.sflag [#allocation3], 1
    %15 = vsyncpa %s14, 0
    %16 = vsyncpa [#allocation6], 0
    %s17 = scalar_lea.sflag [#allocation6], 1
    %18 = vsyncpa %s17, 0
    %19 = vsyncpa [#allocation9], 0
    %s20 = scalar_lea.sflag [#allocation9], 1
    %21 = vsyncpa %s20, 0
    %22 = vsyncpa [#allocation12], 0
    %s23 = scalar_lea.sflag [#allocation12], 1
    %24 = vsyncpa %s23, 0
    %25 = vsyncpa [#allocation4], 0
    %s26 = scalar_lea.sflag [#allocation4], 1
    %27 = vsyncpa %s26, 0
    loop: start=0, step=1, limit=4
    $region2: #{tpu_custom_call.1} parent=1 // loop_pre_header
      _
    $region3: #{tpu_custom_call.1} parent=1 // loop_header
      %s29 = sphi 0, %s33
      %p30 = scmp.ge.s32.totalorder %s29, 4
      %s36 = sphi 0, %s48
      %s37 = sphi 0, %s44
      %s38 = sphi 0, %s36
      %s39 = sphi 0, %s37
      %s40 = sphi 0, %s38
      %s41 = sphi 0, %s39
      %s53 = sphi 0, %s55
      %s56 = sphi 0, %s53
      %s57 = sphi 0, %s56
      %s73 = sphi 0, %s57
      %s81 = sphi 0, %s83
      %s84 = sphi 0, %s81
      %s85 = sphi 0, %s84
      %s101 = sphi 0, %s85
      %s109 = sphi 0, %s111
      %s112 = sphi 0, %s109
      %s113 = sphi 0, %s112
      %s129 = sphi 0, %s113
      %s137 = sphi 0, %s139
      %s140 = sphi 0, %s137
      %s141 = sphi 0, %s140
      %s157 = sphi 0, %s141
      %s165 = sphi 0, %s167
      %s168 = sphi 0, %s165
      %s169 = sphi 0, %s168
      %s185 = sphi 0, %s169
      %s193 = sphi 0, %s195
      %s196 = sphi 0, %s193
      %s197 = sphi 0, %s196
      %s213 = sphi 0, %s197
      %s221 = sphi 0, %s223
      %s224 = sphi 0, %s221
      %s225 = sphi 0, %s224
      %s241 = sphi 0, %s225
      %s247 = sphi 0, %s249
      %s250 = sphi 0, %s247
      %s251 = sphi 0, %s250
      %s267 = sphi 0, %s251
      %s275 = sphi 0, %s277
      %s278 = sphi 0, %s275
      %s279 = sphi 0, %s278
      %s295 = sphi 0, %s279
    $region4: #{tpu_custom_call.1} parent=1 // loop_header_branch
      %32 = sbr.rel (%p30) target = $region8
    $region5: #{tpu_custom_call.1} parent=1 // loop_body
      %s34 = ssub.s32 %s29, 1
      %s35 = ssub.s32 %s29, 2
      %s42 = sadd.s32 1, %s37
      %p43 = scmp.ge.s32.totalorder %s42, 1
      %s44 = scalar_select %p43, 0, %s42
      %s45 = sadd.s32 1, %s36
      %s46 = scalar_select %p43, %s45, %s36
      %p47 = scmp.ge.s32.totalorder %s46, 2
      %s48 = scalar_select %p47, 0, %s46
      %s49 = ssub.s32 %s36, %s48
      %s50 = ssub.s32 %s37, %s44
      %s51 = sor.u32 %s49, %s50
      %p52 = scmp.eq.s32.totalorder %s51, 0
      %s54 = sadd.s32 %s53, 1
      %s55 = scalar_select %p52, %s53, %s54
      %p58 = pneg %p52
      %p59 = scmp.eq.s32.totalorder %s29, 1
      %p60 = por %p58, %p59
      %p61 = scmp.ne.s32.totalorder %s53, %s56
      %p62 = scmp.eq.s32.totalorder %s29, 0
      %p63 = por %p61, %p62
      %p64 = scmp.ne.s32.totalorder %s53, %s56
      %p65 = scmp.eq.s32.totalorder %s34, 1
      %p66 = por %p64, %p65
      %p67 = scmp.ne.s32.totalorder %s56, %s57
      %p68 = scmp.eq.s32.totalorder %s34, 0
      %p69 = por %p67, %p68
      %p70 = scmp.ne.s32.totalorder %s56, %s57
      %p71 = scmp.eq.s32.totalorder %s35, 1
      %p72 = por %p70, %p71
      %p74 = scmp.ne.s32.totalorder %s57, %s73
      %p75 = scmp.eq.s32.totalorder %s35, 0
      %p76 = por %p74, %p75
      %s77 = ssub.s32 %s36, %s48
      %s78 = ssub.s32 %s37, %s44
      %s79 = sor.u32 %s77, %s78
      %p80 = scmp.eq.s32.totalorder %s79, 0
      %s82 = sadd.s32 %s81, 1
      %s83 = scalar_select %p80, %s81, %s82
      %p86 = pneg %p80
      %p87 = scmp.eq.s32.totalorder %s29, 1
      %p88 = por %p86, %p87
      %p89 = scmp.ne.s32.totalorder %s81, %s84
      %p90 = scmp.eq.s32.totalorder %s29, 0
      %p91 = por %p89, %p90
      %p92 = scmp.ne.s32.totalorder %s81, %s84
      %p93 = scmp.eq.s32.totalorder %s34, 1
      %p94 = por %p92, %p93
      %p95 = scmp.ne.s32.totalorder %s84, %s85
      %p96 = scmp.eq.s32.totalorder %s34, 0
      %p97 = por %p95, %p96
      %p98 = scmp.ne.s32.totalorder %s84, %s85
      %p99 = scmp.eq.s32.totalorder %s35, 1
      %p100 = por %p98, %p99
      %p102 = scmp.ne.s32.totalorder %s85, %s101
      %p103 = scmp.eq.s32.totalorder %s35, 0
      %p104 = por %p102, %p103
      %s105 = ssub.s32 %s36, %s48
      %s106 = ssub.s32 %s37, %s44
      %s107 = sor.u32 %s105, %s106
      %p108 = scmp.eq.s32.totalorder %s107, 0
      %s110 = sadd.s32 %s109, 1
      %s111 = scalar_select %p108, %s109, %s110
      %p114 = pneg %p108
      %p115 = scmp.eq.s32.totalorder %s29, 1
      %p116 = por %p114, %p115
      %p117 = scmp.ne.s32.totalorder %s109, %s112
      %p118 = scmp.eq.s32.totalorder %s29, 0
      %p119 = por %p117, %p118
      %p120 = scmp.ne.s32.totalorder %s109, %s112
      %p121 = scmp.eq.s32.totalorder %s34, 1
      %p122 = por %p120, %p121
      %p123 = scmp.ne.s32.totalorder %s112, %s113
      %p124 = scmp.eq.s32.totalorder %s34, 0
      %p125 = por %p123, %p124
      %p126 = scmp.ne.s32.totalorder %s112, %s113
      %p127 = scmp.eq.s32.totalorder %s35, 1
      %p128 = por %p126, %p127
      %p130 = scmp.ne.s32.totalorder %s113, %s129
      %p131 = scmp.eq.s32.totalorder %s35, 0
      %p132 = por %p130, %p131
      %s133 = ssub.s32 %s36, %s48
      %s134 = ssub.s32 %s37, %s44
      %s135 = sor.u32 %s133, %s134
      %p136 = scmp.eq.s32.totalorder %s135, 0
      %s138 = sadd.s32 %s137, 1
      %s139 = scalar_select %p136, %s137, %s138
      %p142 = pneg %p136
      %p143 = scmp.eq.s32.totalorder %s29, 1
      %p144 = por %p142, %p143
      %p145 = scmp.ne.s32.totalorder %s137, %s140
      %p146 = scmp.eq.s32.totalorder %s29, 0
      %p147 = por %p145, %p146
      %p148 = scmp.ne.s32.totalorder %s137, %s140
      %p149 = scmp.eq.s32.totalorder %s34, 1
      %p150 = por %p148, %p149
      %p151 = scmp.ne.s32.totalorder %s140, %s141
      %p152 = scmp.eq.s32.totalorder %s34, 0
      %p153 = por %p151, %p152
      %p154 = scmp.ne.s32.totalorder %s140, %s141
      %p155 = scmp.eq.s32.totalorder %s35, 1
      %p156 = por %p154, %p155
      %p158 = scmp.ne.s32.totalorder %s141, %s157
      %p159 = scmp.eq.s32.totalorder %s35, 0
      %p160 = por %p158, %p159
      %s161 = ssub.s32 %s36, %s48
      %s162 = ssub.s32 %s37, %s44
      %s163 = sor.u32 %s161, %s162
      %p164 = scmp.eq.s32.totalorder %s163, 0
      %s166 = sadd.s32 %s165, 1
      %s167 = scalar_select %p164, %s165, %s166
      %p170 = pneg %p164
      %p171 = scmp.eq.s32.totalorder %s29, 1
      %p172 = por %p170, %p171
      %p173 = scmp.ne.s32.totalorder %s165, %s168
      %p174 = scmp.eq.s32.totalorder %s29, 0
      %p175 = por %p173, %p174
      %p176 = scmp.ne.s32.totalorder %s165, %s168
      %p177 = scmp.eq.s32.totalorder %s34, 1
      %p178 = por %p176, %p177
      %p179 = scmp.ne.s32.totalorder %s168, %s169
      %p180 = scmp.eq.s32.totalorder %s34, 0
      %p181 = por %p179, %p180
      %p182 = scmp.ne.s32.totalorder %s168, %s169
      %p183 = scmp.eq.s32.totalorder %s35, 1
      %p184 = por %p182, %p183
      %p186 = scmp.ne.s32.totalorder %s169, %s185
      %p187 = scmp.eq.s32.totalorder %s35, 0
      %p188 = por %p186, %p187
      %s189 = ssub.s32 %s36, %s48
      %s190 = ssub.s32 %s37, %s44
      %s191 = sor.u32 %s189, %s190
      %p192 = scmp.eq.s32.totalorder %s191, 0
      %s194 = sadd.s32 %s193, 1
      %s195 = scalar_select %p192, %s193, %s194
      %p198 = pneg %p192
      %p199 = scmp.eq.s32.totalorder %s29, 1
      %p200 = por %p198, %p199
      %p201 = scmp.ne.s32.totalorder %s193, %s196
      %p202 = scmp.eq.s32.totalorder %s29, 0
      %p203 = por %p201, %p202
      %p204 = scmp.ne.s32.totalorder %s193, %s196
      %p205 = scmp.eq.s32.totalorder %s34, 1
      %p206 = por %p204, %p205
      %p207 = scmp.ne.s32.totalorder %s196, %s197
      %p208 = scmp.eq.s32.totalorder %s34, 0
      %p209 = por %p207, %p208
      %p210 = scmp.ne.s32.totalorder %s196, %s197
      %p211 = scmp.eq.s32.totalorder %s35, 1
      %p212 = por %p210, %p211
      %p214 = scmp.ne.s32.totalorder %s197, %s213
      %p215 = scmp.eq.s32.totalorder %s35, 0
      %p216 = por %p214, %p215
      %s217 = ssub.s32 %s36, %s48
      %s218 = ssub.s32 %s37, %s44
      %s219 = sor.u32 %s217, %s218
      %p220 = scmp.eq.s32.totalorder %s219, 0
      %s222 = sadd.s32 %s221, 1
      %s223 = scalar_select %p220, %s221, %s222
      %p226 = pneg %p220
      %p227 = scmp.eq.s32.totalorder %s29, 1
      %p228 = por %p226, %p227
      %p229 = scmp.ne.s32.totalorder %s221, %s224
      %p230 = scmp.eq.s32.totalorder %s29, 0
      %p231 = por %p229, %p230
      %p232 = scmp.ne.s32.totalorder %s221, %s224
      %p233 = scmp.eq.s32.totalorder %s34, 1
      %p234 = por %p232, %p233
      %p235 = scmp.ne.s32.totalorder %s224, %s225
      %p236 = scmp.eq.s32.totalorder %s34, 0
      %p237 = por %p235, %p236
      %p238 = scmp.ne.s32.totalorder %s224, %s225
      %p239 = scmp.eq.s32.totalorder %s35, 1
      %p240 = por %p238, %p239
      %p242 = scmp.ne.s32.totalorder %s225, %s241
      %p243 = scmp.eq.s32.totalorder %s35, 0
      %p244 = por %p242, %p243
      %s245 = ssub.s32 %s36, %s48
      %p246 = scmp.eq.s32.totalorder %s245, 0
      %s248 = sadd.s32 %s247, 1
      %s249 = scalar_select %p246, %s247, %s248
      %p252 = pneg %p246
      %p253 = scmp.eq.s32.totalorder %s29, 1
      %p254 = por %p252, %p253
      %p255 = scmp.ne.s32.totalorder %s247, %s250
      %p256 = scmp.eq.s32.totalorder %s29, 0
      %p257 = por %p255, %p256
      %p258 = scmp.ne.s32.totalorder %s247, %s250
      %p259 = scmp.eq.s32.totalorder %s34, 1
      %p260 = por %p258, %p259
      %p261 = scmp.ne.s32.totalorder %s250, %s251
      %p262 = scmp.eq.s32.totalorder %s34, 0
      %p263 = por %p261, %p262
      %p264 = scmp.ne.s32.totalorder %s250, %s251
      %p265 = scmp.eq.s32.totalorder %s35, 1
      %p266 = por %p264, %p265
      %p268 = scmp.ne.s32.totalorder %s251, %s267
      %p269 = scmp.eq.s32.totalorder %s35, 0
      %p270 = por %p268, %p269
      %s271 = ssub.s32 %s36, %s48
      %s272 = ssub.s32 %s37, %s44
      %s273 = sor.u32 %s271, %s272
      %p274 = scmp.eq.s32.totalorder %s273, 0
      %s276 = sadd.s32 %s275, 1
      %s277 = scalar_select %p274, %s275, %s276
      %p280 = pneg %p274
      %p281 = scmp.eq.s32.totalorder %s29, 1
      %p282 = por %p280, %p281
      %p283 = scmp.ne.s32.totalorder %s275, %s278
      %p284 = scmp.eq.s32.totalorder %s29, 0
      %p285 = por %p283, %p284
      %p286 = scmp.ne.s32.totalorder %s275, %s278
      %p287 = scmp.eq.s32.totalorder %s34, 1
      %p288 = por %p286, %p287
      %p289 = scmp.ne.s32.totalorder %s278, %s279
      %p290 = scmp.eq.s32.totalorder %s34, 0
      %p291 = por %p289, %p290
      %p292 = scmp.ne.s32.totalorder %s278, %s279
      %p293 = scmp.eq.s32.totalorder %s35, 1
      %p294 = por %p292, %p293
      %p296 = scmp.ne.s32.totalorder %s279, %s295
      %p297 = scmp.eq.s32.totalorder %s35, 0
      %p298 = por %p296, %p297
      %p299 = scmp.le.s32.totalorder 1, %s29
      %p300 = scmp.lt.s32.totalorder %s29, 3
      %p301 = pnand %p299, %p300
      %p302 = pneg %p301
      // Predicated region
      $region9: #{tpu_custom_call.1} parent=5 // pred_check
        _
      $region10: #{tpu_custom_call.1} parent=5 // pred_check_branch
        %304 = sbr.rel (%p301) target = $region12
      $region11: #{tpu_custom_call.1} parent=5 // pred_region
        %s305 = ssub.s32 %s29, 1
      $region12: #{tpu_custom_call.1} parent=5 // pred_fallthru
        _
      %p306 = scmp.lt.s32.totalorder %s29, 2
      // Predicated region
      $region13: #{tpu_custom_call.1} parent=5 // pred_check
        %p307 = pneg %p306
      $region14: #{tpu_custom_call.1} parent=5 // pred_check_branch
        %309 = sbr.rel (%p307) target = $region16
      $region15: #{tpu_custom_call.1} parent=5 // pred_region
        // Predicated region
        $region17: #{tpu_custom_call.1} parent=15 // pred_check
          %p310 = pneg %p63
        $region18: #{tpu_custom_call.1} parent=15 // pred_check_branch
          %312 = sbr.rel (%p310) target = $region20
        $region19: #{tpu_custom_call.1} parent=15 // pred_region
          %s313 = sand.u32 %s53, 1
          %s314 = scalar_lea.sflag [#allocation3], %s313
          %s315 = sand.u32 %s53, 1
          %s316 = smul.addr %s315, 256
          %s317 = scalar_lea.vmem [#allocation2], %s316
          %s318 = smul.u32 2, %s37
          %s320 = ssub.s32 4096, 4096
          %321 = vsyncadd %s314, %s320
          %s322 = smul.addr %s36, 32
          %s323 = sadd.s32 %s318, %s322
          %s324 = smul.addr %s323, 128
          %s325 = scalar_lea.hbm %s0, %s324
          %s326 = sshll.u32 %s317, 4
          %s327 = int_to_ptr.vmem [resolvable:$true] %s326
          %332 = dma.hbm_to_vmem [thread:$0]  %s325, 4096, %s327, %s314, 256, 256, 16
        $region20: #{tpu_custom_call.1} parent=15 // pred_fallthru
          _
        // Predicated region
        $region21: #{tpu_custom_call.1} parent=15 // pred_check
          %p333 = pneg %p91
        $region22: #{tpu_custom_call.1} parent=15 // pred_check_branch
          %335 = sbr.rel (%p333) target = $region24
        $region23: #{tpu_custom_call.1} parent=15 // pred_region
          %s336 = sand.u32 %s29, 1
          %s337 = scalar_lea.sflag [#allocation6], %s336
          %s338 = sand.u32 %s81, 1
          %s339 = smul.addr %s338, 208
          %s340 = scalar_lea.vmem [#allocation5], %s339
          %s341 = smul.u32 2, %s37
          %s343 = ssub.s32 3328, 3328
          %344 = vsyncadd %s337, %s343
          %s345 = smul.addr %s36, 26
          %s346 = sadd.s32 %s341, %s345
          %s347 = smul.addr %s346, 128
          %s348 = scalar_lea.hbm %s1, %s347
          %s349 = sshll.u32 %s340, 4
          %s350 = int_to_ptr.vmem [resolvable:$true] %s349
          %355 = dma.hbm_to_vmem [thread:$0]  %s348, 3328, %s350, %s337, 256, 256, 16
        $region24: #{tpu_custom_call.1} parent=15 // pred_fallthru
          _
        // Predicated region
        $region25: #{tpu_custom_call.1} parent=15 // pred_check
          %p356 = pneg %p119
        $region26: #{tpu_custom_call.1} parent=15 // pred_check_branch
          %358 = sbr.rel (%p356) target = $region28
        $region27: #{tpu_custom_call.1} parent=15 // pred_region
          %s359 = smul.u32 2, %s37
          %p360 = scmp.lt.s32.totalorder %s36, 1
          %s361 = scalar_select %p360, %s36, 1
          %p362 = scmp.lt.s32.totalorder %s359, 1
          %s363 = scalar_select %p362, %s359, 1
          %s364 = smul.addr %s361, 2
          %s365 = sadd.s32 %s363, %s364
          %s366 = smul.addr %s365, 8
          %s367 = scalar_lea.vmem %s2, %s366
          %s368 = smul.u32 2, %s37
        $region28: #{tpu_custom_call.1} parent=15 // pred_fallthru
          _
        // Predicated region
        $region29: #{tpu_custom_call.1} parent=15 // pred_check
          %p369 = pneg %p147
        $region30: #{tpu_custom_call.1} parent=15 // pred_check_branch
          %371 = sbr.rel (%p369) target = $region32
        $region31: #{tpu_custom_call.1} parent=15 // pred_region
          %s372 = sand.u32 %s29, 1
          %s373 = scalar_lea.sflag [#allocation6], %s372
          %s374 = sand.u32 %s137, 1
          %s375 = smul.addr %s374, 16
          %s376 = scalar_lea.vmem [#allocation7], %s375
          %s377 = smul.u32 2, %s37
          %s379 = ssub.s32 256, 256
          %380 = vsyncadd %s373, %s379
          %s381 = smul.addr %s36, 2
          %s382 = sadd.s32 %s377, %s381
          %s383 = smul.addr %s382, 128
          %s384 = scalar_lea.hbm %s3, %s383
          %s386 = sshll.u32 %s376, 4
          %s387 = int_to_ptr.vmem [resolvable:$true] %s386
          %389 = dma.hbm_to_vmem [thread:$0]  %s384, 256, %s387, %s373
        $region32: #{tpu_custom_call.1} parent=15 // pred_fallthru
          _
        // Predicated region
        $region33: #{tpu_custom_call.1} parent=15 // pred_check
          %p390 = pneg %p175
        $region34: #{tpu_custom_call.1} parent=15 // pred_check_branch
          %392 = sbr.rel (%p390) target = $region36
        $region35: #{tpu_custom_call.1} parent=15 // pred_region
          %s393 = sand.u32 %s29, 1
          %s394 = scalar_lea.sflag [#allocation9], %s393
          %s395 = sand.u32 %s165, 1
          %s396 = smul.addr %s395, 16
          %s397 = scalar_lea.vmem [#allocation8], %s396
          %s398 = smul.u32 2, %s37
          %s400 = ssub.s32 256, 256
          %401 = vsyncadd %s394, %s400
          %s402 = smul.addr %s36, 2
          %s403 = sadd.s32 %s398, %s402
          %s404 = smul.addr %s403, 128
          %s405 = scalar_lea.hbm %s4, %s404
          %s407 = sshll.u32 %s397, 4
          %s408 = int_to_ptr.vmem [resolvable:$true] %s407
          %410 = dma.hbm_to_vmem [thread:$0]  %s405, 256, %s408, %s394
        $region36: #{tpu_custom_call.1} parent=15 // pred_fallthru
          _
        // Predicated region
        $region37: #{tpu_custom_call.1} parent=15 // pred_check
          %p411 = pneg %p203
        $region38: #{tpu_custom_call.1} parent=15 // pred_check_branch
          %413 = sbr.rel (%p411) target = $region40
        $region39: #{tpu_custom_call.1} parent=15 // pred_region
          %s414 = sand.u32 %s29, 1
          %s415 = scalar_lea.sflag [#allocation9], %s414
          %s416 = sand.u32 %s193, 1
          %s417 = smul.addr %s416, 16
          %s418 = scalar_lea.vmem [#allocation10], %s417
          %s419 = smul.u32 2, %s37
          %s421 = ssub.s32 256, 256
          %422 = vsyncadd %s415, %s421
          %s423 = smul.addr %s36, 2
          %s424 = sadd.s32 %s419, %s423
          %s425 = smul.addr %s424, 128
          %s426 = scalar_lea.hbm %s5, %s425
          %s428 = sshll.u32 %s418, 4
          %s429 = int_to_ptr.vmem [resolvable:$true] %s428
          %431 = dma.hbm_to_vmem [thread:$0]  %s426, 256, %s429, %s415
        $region40: #{tpu_custom_call.1} parent=15 // pred_fallthru
          _
        // Predicated region
        $region41: #{tpu_custom_call.1} parent=15 // pred_check
          %p432 = pneg %p231
        $region42: #{tpu_custom_call.1} parent=15 // pred_check_branch
          %434 = sbr.rel (%p432) target = $region44
        $region43: #{tpu_custom_call.1} parent=15 // pred_region
          %s435 = sand.u32 %s221, 1
          %s436 = scalar_lea.sflag [#allocation12], %s435
          %s437 = sand.u32 %s221, 1
          %s438 = smul.addr %s437, 16
          %s439 = scalar_lea.vmem [#allocation11], %s438
          %s440 = smul.u32 2, %s37
          %s442 = ssub.s32 256, 256
          %443 = vsyncadd %s436, %s442
          %s444 = smul.addr %s36, 2
          %s445 = sadd.s32 %s440, %s444
          %s446 = smul.addr %s445, 128
          %s447 = scalar_lea.hbm %s6, %s446
          %s449 = sshll.u32 %s439, 4
          %s450 = int_to_ptr.vmem [resolvable:$true] %s449
          %452 = dma.hbm_to_vmem [thread:$0]  %s447, 256, %s450, %s436
        $region44: #{tpu_custom_call.1} parent=15 // pred_fallthru
          _
        // Predicated region
        $region45: #{tpu_custom_call.1} parent=15 // pred_check
          %p453 = pneg %p257
        $region46: #{tpu_custom_call.1} parent=15 // pred_check_branch
          %455 = sbr.rel (%p453) target = $region48
        $region47: #{tpu_custom_call.1} parent=15 // pred_region
          %p456 = scmp.lt.s32.totalorder %s36, 1
          %s457 = scalar_select %p456, %s36, 1
          %s458 = smul.addr %s457, 8
          %s459 = scalar_lea.vmem %s7, %s458
        $region48: #{tpu_custom_call.1} parent=15 // pred_fallthru
          _
      $region16: #{tpu_custom_call.1} parent=5 // pred_fallthru
        _
      %p460 = scmp.le.s32.totalorder 1, %s29
      %p461 = scmp.lt.s32.totalorder %s29, 3
      %p462 = pnand %p460, %p461
      %p463 = pneg %p462
      // Predicated region
      $region49: #{tpu_custom_call.1} parent=5 // pred_check
        _
      $region50: #{tpu_custom_call.1} parent=5 // pred_check_branch
        %465 = sbr.rel (%p462) target = $region52
      $region51: #{tpu_custom_call.1} parent=5 // pred_region
        %s466 = ssub.s32 %s29, 1
        %s467 = sand.u32 %s56, 1
        %s468 = scalar_lea.sflag [#allocation3], %s467
        %s469 = sand.u32 %s56, 1
        %s470 = smul.addr %s469, 256
        %s471 = scalar_lea.vmem [#allocation2], %s470
        // Predicated region
        $region53: #{tpu_custom_call.1} parent=51 // pred_check
          %p472 = pneg %p69
        $region54: #{tpu_custom_call.1} parent=51 // pred_check_branch
          %474 = sbr.rel (%p472) target = $region56
        $region55: #{tpu_custom_call.1} parent=51 // pred_region
          %475 = dma.done %s468, 4096
        $region56: #{tpu_custom_call.1} parent=51 // pred_fallthru
          _
        %s476 = sand.u32 %s34, 1
        %s477 = scalar_lea.sflag [#allocation6], %s476
        %s478 = sand.u32 %s84, 1
        %s479 = smul.addr %s478, 208
        %s480 = scalar_lea.vmem [#allocation5], %s479
        // Predicated region
        $region57: #{tpu_custom_call.1} parent=51 // pred_check
          %p481 = pneg %p97
        $region58: #{tpu_custom_call.1} parent=51 // pred_check_branch
          %483 = sbr.rel (%p481) target = $region60
        $region59: #{tpu_custom_call.1} parent=51 // pred_region
          %484 = dma.done %s477, 3328
        $region60: #{tpu_custom_call.1} parent=51 // pred_fallthru
          _
        %s485 = sand.u32 %s34, 1
        %s486 = scalar_lea.sflag [#allocation6], %s485
        %s487 = sand.u32 %s140, 1
        %s488 = smul.addr %s487, 16
        %s489 = scalar_lea.vmem [#allocation7], %s488
        // Predicated region
        $region61: #{tpu_custom_call.1} parent=51 // pred_check
          %p490 = pneg %p153
        $region62: #{tpu_custom_call.1} parent=51 // pred_check_branch
          %492 = sbr.rel (%p490) target = $region64
        $region63: #{tpu_custom_call.1} parent=51 // pred_region
          %493 = dma.done %s486, 256
        $region64: #{tpu_custom_call.1} parent=51 // pred_fallthru
          _
        %s494 = sand.u32 %s34, 1
        %s495 = scalar_lea.sflag [#allocation9], %s494
        %s496 = sand.u32 %s168, 1
        %s497 = smul.addr %s496, 16
        %s498 = scalar_lea.vmem [#allocation8], %s497
        // Predicated region
        $region65: #{tpu_custom_call.1} parent=51 // pred_check
          %p499 = pneg %p181
        $region66: #{tpu_custom_call.1} parent=51 // pred_check_branch
          %501 = sbr.rel (%p499) target = $region68
        $region67: #{tpu_custom_call.1} parent=51 // pred_region
          %502 = dma.done %s495, 256
        $region68: #{tpu_custom_call.1} parent=51 // pred_fallthru
          _
        %s503 = sand.u32 %s34, 1
        %s504 = scalar_lea.sflag [#allocation9], %s503
        %s505 = sand.u32 %s196, 1
        %s506 = smul.addr %s505, 16
        %s507 = scalar_lea.vmem [#allocation10], %s506
        // Predicated region
        $region69: #{tpu_custom_call.1} parent=51 // pred_check
          %p508 = pneg %p209
        $region70: #{tpu_custom_call.1} parent=51 // pred_check_branch
          %510 = sbr.rel (%p508) target = $region72
        $region71: #{tpu_custom_call.1} parent=51 // pred_region
          %511 = dma.done %s504, 256
        $region72: #{tpu_custom_call.1} parent=51 // pred_fallthru
          _
        %s512 = sand.u32 %s224, 1
        %s513 = scalar_lea.sflag [#allocation12], %s512
        %s514 = sand.u32 %s224, 1
        %s515 = smul.addr %s514, 16
        %s516 = scalar_lea.vmem [#allocation11], %s515
        // Predicated region
        $region73: #{tpu_custom_call.1} parent=51 // pred_check
          %p517 = pneg %p237
        $region74: #{tpu_custom_call.1} parent=51 // pred_check_branch
          %519 = sbr.rel (%p517) target = $region76
        $region75: #{tpu_custom_call.1} parent=51 // pred_region
          %520 = dma.done %s513, 256
        $region76: #{tpu_custom_call.1} parent=51 // pred_fallthru
          _
        %s521 = sand.u32 %s56, 1
        %s522 = scalar_lea.sflag [#allocation3], %s521
        %s523 = sand.u32 %s56, 1
        %s524 = smul.addr %s523, 256
        %s525 = scalar_lea.vmem [#allocation2], %s524
        %p526 = pneg %p69
        %p527 = pneg %p66
        %s528 = sand.u32 %s34, 1
        %s529 = scalar_lea.sflag [#allocation6], %s528
        %s530 = sand.u32 %s84, 1
        %s531 = smul.addr %s530, 208
        %s532 = scalar_lea.vmem [#allocation5], %s531
        %p533 = pneg %p97
        %p534 = pneg %p94
        %s535 = smul.u32 2, %s39
        %p536 = scmp.lt.s32.totalorder %s38, 1
        %s537 = scalar_select %p536, %s38, 1
        %p538 = scmp.lt.s32.totalorder %s535, 1
        %s539 = scalar_select %p538, %s535, 1
        %s540 = smul.addr %s537, 2
        %s541 = sadd.s32 %s539, %s540
        %s542 = smul.addr %s541, 8
        %s543 = scalar_lea.vmem %s2, %s542
        %p544 = pneg %p125
        %p545 = pneg %p122
        %s546 = sand.u32 %s34, 1
        %s547 = scalar_lea.sflag [#allocation6], %s546
        %s548 = sand.u32 %s140, 1
        %s549 = smul.addr %s548, 16
        %s550 = scalar_lea.vmem [#allocation7], %s549
        %p551 = pneg %p153
        %p552 = pneg %p150
        %s553 = sand.u32 %s34, 1
        %s554 = scalar_lea.sflag [#allocation9], %s553
        %s555 = sand.u32 %s168, 1
        %s556 = smul.addr %s555, 16
        %s557 = scalar_lea.vmem [#allocation8], %s556
        %p558 = pneg %p181
        %p559 = pneg %p178
        %s560 = sand.u32 %s34, 1
        %s561 = scalar_lea.sflag [#allocation9], %s560
        %s562 = sand.u32 %s196, 1
        %s563 = smul.addr %s562, 16
        %s564 = scalar_lea.vmem [#allocation10], %s563
        %p565 = pneg %p209
        %p566 = pneg %p206
        %s567 = sand.u32 %s224, 1
        %s568 = scalar_lea.sflag [#allocation12], %s567
        %s569 = sand.u32 %s224, 1
        %s570 = smul.addr %s569, 16
        %s571 = scalar_lea.vmem [#allocation11], %s570
        %p572 = pneg %p237
        %p573 = pneg %p234
        %p574 = scmp.lt.s32.totalorder %s38, 1
        %s575 = scalar_select %p574, %s38, 1
        %s576 = smul.addr %s575, 8
        %s577 = scalar_lea.vmem %s7, %s576
        %p578 = pneg %p263
        %p579 = pneg %p260
        %p580 = pneg %p291
        %p581 = pneg %p288
        %s582 = sand.u32 %s278, 1
        %s583 = scalar_lea.sflag [#allocation4], %s582
        %s584 = sand.u32 %s278, 1
        %s585 = smul.addr %s584, 256
        %s586 = scalar_lea.vmem [#allocation13], %s585
        %s587 = smul.u32 2, %s39
        %s588 = smul.u32 2, %s39
        %s589 = smul.u32 2, %s39
        %p590 = scmp.lt.s32.totalorder %s38, 1
        %s591 = scalar_select %p590, %s38, 1
        %p592 = scmp.lt.s32.totalorder %s589, 1
        %s593 = scalar_select %p592, %s589, 1
        %s594 = smul.addr %s591, 2
        %s595 = sadd.s32 %s593, %s594
        %s596 = smul.addr %s595, 8
        %s597 = scalar_lea.vmem %s2, %s596
        %s598 = smul.u32 2, %s39
        %s599 = smul.u32 2, %s39
        %s600 = smul.u32 2, %s39
        %s601 = smul.u32 2, %s39
        %s602 = smul.u32 2, %s39
        %p603 = scmp.lt.s32.totalorder %s38, 1
        %s604 = scalar_select %p603, %s38, 1
        %s605 = smul.addr %s604, 8
        %s606 = scalar_lea.vmem %s7, %s605
        %s607 = smul.u32 2, %s39
        %v608 = vld [vmem:[%s606] sm:$0xff]
        %s609 = scalar_lea.vmem %s471, 240 [#allocation2]
        %v610 = vld [vmem:[%s609] sm:$0xff]
        %v611 = vld [vmem:[%s609 + $0x8] sm:$0xff]
        %v612 = vld [vmem:[%s597] sm:$0xff]
        %v613 = vld [vmem:[%s597 + $0x8] sm:$0xff]
        %v614 = vld [vmem:[%s489] sm:$0xff]
        %v615 = vld [vmem:[%s489 + $0x8] sm:$0xff]
        %617 = vset.pattern.permute.xlu0 0
        %618 = vperm.xlu0 %617, %v608
        %v619 = vpop.permute.xlu0 %618
        %v621 = vmul.f32 %v614, %v619
        %v622 = vmul.f32 %v615, %v619
        %v623 = vld [vmem:[%s498] sm:$0xff]
        %v624 = vld [vmem:[%s498 + $0x8] sm:$0xff]
        %625 = vset.pattern.permute.xlu0 1
        %626 = vperm.xlu0 %625, %v608
        %v627 = vpop.permute.xlu0 %626
        %v629 = vmul.f32 %v623, %v627
        %v630 = vmul.f32 %v624, %v627
        %v631 = vmax.f32 %v621, %v629
        %v632 = vmax.f32 %v622, %v630
        %v633 = vld [vmem:[%s507] sm:$0xff]
        %v634 = vld [vmem:[%s507 + $0x8] sm:$0xff]
        %635 = vset.pattern.permute.xlu0 2
        %636 = vperm.xlu0 %635, %v608
        %v637 = vpop.permute.xlu0 %636
        %v639 = vmul.f32 %v633, %v637
        %v640 = vmul.f32 %v634, %v637
        %v641 = vld [vmem:[%s516] sm:$0xff]
        %v642 = vld [vmem:[%s516 + $0x8] sm:$0xff]
        %643 = vset.pattern.permute.xlu0 3
        %644 = vperm.xlu0 %643, %v608
        %v645 = vpop.permute.xlu0 %644
        %v647 = vmul.f32 %v641, %v645
        %v648 = vmul.f32 %v642, %v645
        %v649 = vmax.f32 %v639, %v647
        %v650 = vmax.f32 %v640, %v648
        %v651 = vmax.f32 %v610, 0.3
        %v652 = vmax.f32 %v611, 0.3
        %v653 = vmin.f32 %v651, 1.0
        %v654 = vmin.f32 %v652, 1.0
        %v655 = vsub.f32 %v653, 0.3
        %v656 = vsub.f32 %v654, 0.3
        %v657 = vmul.f32 %v655, 1.4285715
        %v658 = vmul.f32 %v656, 1.4285715
        %v659 = vmax.f32 %v612, 0.3
        %v660 = vmax.f32 %v613, 0.3
        %v661 = vmin.f32 %v659, 1.0
        %v662 = vmin.f32 %v660, 1.0
        %v663 = vsub.f32 %v661, 0.3
        %v664 = vsub.f32 %v662, 0.3
        %v665 = vmul.f32 %v663, 1.4285715
        %v666 = vmul.f32 %v664, 1.4285715
        %v667 = vsub.f32 1.0, %v657
        %v668 = vsub.f32 1.0, %v658
        %v669 = vmul.f32 %v665, %v667
        %v670 = vmul.f32 %v666, %v668
        %671 = vset.pattern.permute.xlu0 4
        %672 = vperm.xlu0 %671, %v608
        %v673 = vpop.permute.xlu0 %672
        %v675 = vmul.f32 %v649, %v673
        %v676 = vmul.f32 %v650, %v673
        %v677 = vsub.f32 1.0, %v675
        %v678 = vsub.f32 1.0, %v676
        %679 = vset.pattern.permute.xlu0 5
        %680 = vperm.xlu0 %679, %v608
        %v681 = vpop.permute.xlu0 %680
        %v683 = vmul.f32 %v681, %v677
        %v684 = vmul.f32 %v681, %v678
        %v685 = vsub.f32 1.0, %v669
        %v686 = vsub.f32 1.0, %v670
        %v687 = vmul.f32 %v683, %v685
        %v688 = vmul.f32 %v684, %v686
        %v689 = vmul.f32 %v681, %v669
        %v690 = vmul.f32 %v681, %v670
        %v691 = vmul.f32 %v689, %v665
        %v692 = vmul.f32 %v690, %v666
        %v693 = vmul.f32 %v681, %v631
        %v694 = vmul.f32 %v681, %v632
        %695 = vset.pattern.permute.xlu0 6
        %696 = vperm.xlu0 %695, %v608
        %v697 = vpop.permute.xlu0 %696
        %v699 = vadd.f32 %v693, %v697
        %v700 = vadd.f32 %v694, %v697
        %v701 = vld [vmem:[%s471] sm:$0xff]
        %v702 = vld [vmem:[%s471 + $0x8] sm:$0xff]
        %v703 = vmul.f32 %v701, %v687
        %v704 = vmul.f32 %v702, %v688
        %v705 = vld [vmem:[%s480] sm:$0xff]
        %v706 = vld [vmem:[%s480 + $0x8] sm:$0xff]
        %v707 = vmul.f32 %v705, %v691
        %v708 = vmul.f32 %v706, %v692
        %v709 = vadd.f32 %v703, %v707
        %v710 = vadd.f32 %v704, %v708
        %v711 = vadd.f32 %v709, %v699
        %v712 = vadd.f32 %v710, %v700
        %713 = vst [vmem:[%s586] sm:$0xff] %v711
        %714 = vst [vmem:[%s586 + $0x8] sm:$0xff] %v712
        %s715 = scalar_lea.vmem %s471, 16 [#allocation2]
        %v716 = vld [vmem:[%s715] sm:$0xff]
        %v717 = vld [vmem:[%s715 + $0x8] sm:$0xff]
        %v718 = vmul.f32 %v716, %v687
        %v719 = vmul.f32 %v717, %v688
        %s720 = scalar_lea.vmem %s480, 16 [#allocation5]
        %v721 = vld [vmem:[%s720] sm:$0xff]
        %v722 = vld [vmem:[%s720 + $0x8] sm:$0xff]
        %v723 = vmul.f32 %v721, %v691
        %v724 = vmul.f32 %v722, %v692
        %v725 = vadd.f32 %v718, %v723
        %v726 = vadd.f32 %v719, %v724
        %v727 = vadd.f32 %v725, %v699
        %v728 = vadd.f32 %v726, %v700
        %s729 = scalar_lea.vmem %s586, 16 [#allocation13]
        %730 = vst [vmem:[%s729] sm:$0xff] %v727
        %731 = vst [vmem:[%s729 + $0x8] sm:$0xff] %v728
        %s732 = scalar_lea.vmem %s471, 32 [#allocation2]
        %v733 = vld [vmem:[%s732] sm:$0xff]
        %v734 = vld [vmem:[%s732 + $0x8] sm:$0xff]
        %v735 = vmul.f32 %v733, %v687
        %v736 = vmul.f32 %v734, %v688
        %s737 = scalar_lea.vmem %s480, 32 [#allocation5]
        %v738 = vld [vmem:[%s737] sm:$0xff]
        %v739 = vld [vmem:[%s737 + $0x8] sm:$0xff]
        %v740 = vmul.f32 %v738, %v691
        %v741 = vmul.f32 %v739, %v692
        %v742 = vadd.f32 %v735, %v740
        %v743 = vadd.f32 %v736, %v741
        %v744 = vadd.f32 %v742, %v699
        %v745 = vadd.f32 %v743, %v700
        %s746 = scalar_lea.vmem %s586, 32 [#allocation13]
        %747 = vst [vmem:[%s746] sm:$0xff] %v744
        %748 = vst [vmem:[%s746 + $0x8] sm:$0xff] %v745
        %s749 = scalar_lea.vmem %s471, 48 [#allocation2]
        %v750 = vld [vmem:[%s749] sm:$0xff]
        %v751 = vld [vmem:[%s749 + $0x8] sm:$0xff]
        %v752 = vmul.f32 %v750, %v687
        %v753 = vmul.f32 %v751, %v688
        %s754 = scalar_lea.vmem %s480, 48 [#allocation5]
        %v755 = vld [vmem:[%s754] sm:$0xff]
        %v756 = vld [vmem:[%s754 + $0x8] sm:$0xff]
        %v757 = vmul.f32 %v755, %v691
        %v758 = vmul.f32 %v756, %v692
        %v759 = vadd.f32 %v752, %v757
        %v760 = vadd.f32 %v753, %v758
        %v761 = vadd.f32 %v759, %v699
        %v762 = vadd.f32 %v760, %v700
        %s763 = scalar_lea.vmem %s586, 48 [#allocation13]
        %764 = vst [vmem:[%s763] sm:$0xff] %v761
        %765 = vst [vmem:[%s763 + $0x8] sm:$0xff] %v762
        %s766 = scalar_lea.vmem %s471, 64 [#allocation2]
        %v767 = vld [vmem:[%s766] sm:$0xff]
        %v768 = vld [vmem:[%s766 + $0x8] sm:$0xff]
        %v769 = vmul.f32 %v767, %v687
        %v770 = vmul.f32 %v768, %v688
        %s771 = scalar_lea.vmem %s480, 64 [#allocation5]
        %v772 = vld [vmem:[%s771] sm:$0xff]
        %v773 = vld [vmem:[%s771 + $0x8] sm:$0xff]
        %v774 = vmul.f32 %v772, %v691
        %v775 = vmul.f32 %v773, %v692
        %v776 = vadd.f32 %v769, %v774
        %v777 = vadd.f32 %v770, %v775
        %v778 = vadd.f32 %v776, %v699
        %v779 = vadd.f32 %v777, %v700
        %s780 = scalar_lea.vmem %s586, 64 [#allocation13]
        %781 = vst [vmem:[%s780] sm:$0xff] %v778
        %782 = vst [vmem:[%s780 + $0x8] sm:$0xff] %v779
        %s783 = scalar_lea.vmem %s471, 80 [#allocation2]
        %v784 = vld [vmem:[%s783] sm:$0xff]
        %v785 = vld [vmem:[%s783 + $0x8] sm:$0xff]
        %v786 = vmul.f32 %v784, %v687
        %v787 = vmul.f32 %v785, %v688
        %s788 = scalar_lea.vmem %s480, 80 [#allocation5]
        %v789 = vld [vmem:[%s788] sm:$0xff]
        %v790 = vld [vmem:[%s788 + $0x8] sm:$0xff]
        %v791 = vmul.f32 %v789, %v691
        %v792 = vmul.f32 %v790, %v692
        %v793 = vadd.f32 %v786, %v791
        %v794 = vadd.f32 %v787, %v792
        %v795 = vadd.f32 %v793, %v699
        %v796 = vadd.f32 %v794, %v700
        %s797 = scalar_lea.vmem %s586, 80 [#allocation13]
        %798 = vst [vmem:[%s797] sm:$0xff] %v795
        %799 = vst [vmem:[%s797 + $0x8] sm:$0xff] %v796
        %s800 = scalar_lea.vmem %s471, 96 [#allocation2]
        %v801 = vld [vmem:[%s800] sm:$0xff]
        %v802 = vld [vmem:[%s800 + $0x8] sm:$0xff]
        %v803 = vmul.f32 %v801, %v687
        %v804 = vmul.f32 %v802, %v688
        %s805 = scalar_lea.vmem %s480, 96 [#allocation5]
        %v806 = vld [vmem:[%s805] sm:$0xff]
        %v807 = vld [vmem:[%s805 + $0x8] sm:$0xff]
        %v808 = vmul.f32 %v806, %v691
        %v809 = vmul.f32 %v807, %v692
        %v810 = vadd.f32 %v803, %v808
        %v811 = vadd.f32 %v804, %v809
        %v812 = vadd.f32 %v810, %v699
        %v813 = vadd.f32 %v811, %v700
        %s814 = scalar_lea.vmem %s586, 96 [#allocation13]
        %815 = vst [vmem:[%s814] sm:$0xff] %v812
        %816 = vst [vmem:[%s814 + $0x8] sm:$0xff] %v813
        %s817 = scalar_lea.vmem %s471, 112 [#allocation2]
        %v818 = vld [vmem:[%s817] sm:$0xff]
        %v819 = vld [vmem:[%s817 + $0x8] sm:$0xff]
        %v820 = vmul.f32 %v818, %v687
        %v821 = vmul.f32 %v819, %v688
        %s822 = scalar_lea.vmem %s480, 112 [#allocation5]
        %v823 = vld [vmem:[%s822] sm:$0xff]
        %v824 = vld [vmem:[%s822 + $0x8] sm:$0xff]
        %v825 = vmul.f32 %v823, %v691
        %v826 = vmul.f32 %v824, %v692
        %v827 = vadd.f32 %v820, %v825
        %v828 = vadd.f32 %v821, %v826
        %v829 = vadd.f32 %v827, %v699
        %v830 = vadd.f32 %v828, %v700
        %s831 = scalar_lea.vmem %s586, 112 [#allocation13]
        %832 = vst [vmem:[%s831] sm:$0xff] %v829
        %833 = vst [vmem:[%s831 + $0x8] sm:$0xff] %v830
        %s834 = scalar_lea.vmem %s471, 128 [#allocation2]
        %v835 = vld [vmem:[%s834] sm:$0xff]
        %v836 = vld [vmem:[%s834 + $0x8] sm:$0xff]
        %v837 = vmul.f32 %v835, %v687
        %v838 = vmul.f32 %v836, %v688
        %s839 = scalar_lea.vmem %s480, 128 [#allocation5]
        %v840 = vld [vmem:[%s839] sm:$0xff]
        %v841 = vld [vmem:[%s839 + $0x8] sm:$0xff]
        %v842 = vmul.f32 %v840, %v691
        %v843 = vmul.f32 %v841, %v692
        %v844 = vadd.f32 %v837, %v842
        %v845 = vadd.f32 %v838, %v843
        %v846 = vadd.f32 %v844, %v699
        %v847 = vadd.f32 %v845, %v700
        %s848 = scalar_lea.vmem %s586, 128 [#allocation13]
        %849 = vst [vmem:[%s848] sm:$0xff] %v846
        %850 = vst [vmem:[%s848 + $0x8] sm:$0xff] %v847
        %s851 = scalar_lea.vmem %s471, 144 [#allocation2]
        %v852 = vld [vmem:[%s851] sm:$0xff]
        %v853 = vld [vmem:[%s851 + $0x8] sm:$0xff]
        %v854 = vmul.f32 %v852, %v687
        %v855 = vmul.f32 %v853, %v688
        %s856 = scalar_lea.vmem %s480, 144 [#allocation5]
        %v857 = vld [vmem:[%s856] sm:$0xff]
        %v858 = vld [vmem:[%s856 + $0x8] sm:$0xff]
        %v859 = vmul.f32 %v857, %v691
        %v860 = vmul.f32 %v858, %v692
        %v861 = vadd.f32 %v854, %v859
        %v862 = vadd.f32 %v855, %v860
        %v863 = vadd.f32 %v861, %v699
        %v864 = vadd.f32 %v862, %v700
        %s865 = scalar_lea.vmem %s586, 144 [#allocation13]
        %866 = vst [vmem:[%s865] sm:$0xff] %v863
        %867 = vst [vmem:[%s865 + $0x8] sm:$0xff] %v864
        %s868 = scalar_lea.vmem %s471, 160 [#allocation2]
        %v869 = vld [vmem:[%s868] sm:$0xff]
        %v870 = vld [vmem:[%s868 + $0x8] sm:$0xff]
        %v871 = vmul.f32 %v869, %v687
        %v872 = vmul.f32 %v870, %v688
        %s873 = scalar_lea.vmem %s480, 160 [#allocation5]
        %v874 = vld [vmem:[%s873] sm:$0xff]
        %v875 = vld [vmem:[%s873 + $0x8] sm:$0xff]
        %v876 = vmul.f32 %v874, %v691
        %v877 = vmul.f32 %v875, %v692
        %v878 = vadd.f32 %v871, %v876
        %v879 = vadd.f32 %v872, %v877
        %v880 = vadd.f32 %v878, %v699
        %v881 = vadd.f32 %v879, %v700
        %s882 = scalar_lea.vmem %s586, 160 [#allocation13]
        %883 = vst [vmem:[%s882] sm:$0xff] %v880
        %884 = vst [vmem:[%s882 + $0x8] sm:$0xff] %v881
        %s885 = scalar_lea.vmem %s471, 176 [#allocation2]
        %v886 = vld [vmem:[%s885] sm:$0xff]
        %v887 = vld [vmem:[%s885 + $0x8] sm:$0xff]
        %v888 = vmul.f32 %v886, %v687
        %v889 = vmul.f32 %v887, %v688
        %s890 = scalar_lea.vmem %s480, 176 [#allocation5]
        %v891 = vld [vmem:[%s890] sm:$0xff]
        %v892 = vld [vmem:[%s890 + $0x8] sm:$0xff]
        %v893 = vmul.f32 %v891, %v691
        %v894 = vmul.f32 %v892, %v692
        %v895 = vadd.f32 %v888, %v893
        %v896 = vadd.f32 %v889, %v894
        %v897 = vadd.f32 %v895, %v699
        %v898 = vadd.f32 %v896, %v700
        %s899 = scalar_lea.vmem %s586, 176 [#allocation13]
        %900 = vst [vmem:[%s899] sm:$0xff] %v897
        %901 = vst [vmem:[%s899 + $0x8] sm:$0xff] %v898
        %s902 = scalar_lea.vmem %s471, 192 [#allocation2]
        %v903 = vld [vmem:[%s902] sm:$0xff]
        %v904 = vld [vmem:[%s902 + $0x8] sm:$0xff]
        %v905 = vmul.f32 %v903, %v687
        %v906 = vmul.f32 %v904, %v688
        %s907 = scalar_lea.vmem %s480, 192 [#allocation5]
        %v908 = vld [vmem:[%s907] sm:$0xff]
        %v909 = vld [vmem:[%s907 + $0x8] sm:$0xff]
        %v910 = vmul.f32 %v908, %v691
        %v911 = vmul.f32 %v909, %v692
        %v912 = vadd.f32 %v905, %v910
        %v913 = vadd.f32 %v906, %v911
        %v914 = vadd.f32 %v912, %v699
        %v915 = vadd.f32 %v913, %v700
        %s916 = scalar_lea.vmem %s586, 192 [#allocation13]
        %917 = vst [vmem:[%s916] sm:$0xff] %v914
        %918 = vst [vmem:[%s916 + $0x8] sm:$0xff] %v915
        %s919 = scalar_lea.vmem %s471, 208 [#allocation2]
        %v920 = vld [vmem:[%s919] sm:$0xff]
        %v921 = vld [vmem:[%s919 + $0x8] sm:$0xff]
        %s922 = scalar_lea.vmem %s586, 208 [#allocation13]
        %923 = vst [vmem:[%s922] sm:$0xff] %v920
        %924 = vst [vmem:[%s922 + $0x8] sm:$0xff] %v921
        %s925 = scalar_lea.vmem %s471, 224 [#allocation2]
        %v926 = vld [vmem:[%s925] sm:$0xff]
        %v927 = vld [vmem:[%s925 + $0x8] sm:$0xff]
        %s928 = scalar_lea.vmem %s586, 224 [#allocation13]
        %929 = vst [vmem:[%s928] sm:$0xff] %v926
        %930 = vst [vmem:[%s928 + $0x8] sm:$0xff] %v927
        %v931 = vld [vmem:[%s609] sm:$0xff]
        %v932 = vld [vmem:[%s609 + $0x8] sm:$0xff]
        %s933 = scalar_lea.vmem %s586, 240 [#allocation13]
        %934 = vst [vmem:[%s933] sm:$0xff] %v931
        %935 = vst [vmem:[%s933 + $0x8] sm:$0xff] %v932
        %s936 = sand.u32 %s278, 1
        %s937 = scalar_lea.sflag [#allocation4], %s936
        %s938 = sand.u32 %s278, 1
        %s939 = smul.addr %s938, 256
        %s940 = scalar_lea.vmem [#allocation13], %s939
        // Predicated region
        $region77: #{tpu_custom_call.1} parent=51 // pred_check
          %p941 = pneg %p288
        $region78: #{tpu_custom_call.1} parent=51 // pred_check_branch
          %943 = sbr.rel (%p941) target = $region80
        $region79: #{tpu_custom_call.1} parent=51 // pred_region
          %s944 = smul.u32 2, %s39
          %s946 = ssub.s32 4096, 4096
          %947 = vsyncadd %s937, %s946
          %s948 = smul.addr %s38, 32
          %s949 = sadd.s32 %s944, %s948
          %s950 = smul.addr %s949, 128
          %s951 = scalar_lea.hbm %s8, %s950
          %s952 = sshll.u32 %s940, 4
          %s953 = int_to_ptr.vmem [resolvable:$true] %s952
          %958 = dma.vmem_to_hbm [thread:$0]  %s953, 4096, %s951, %s937, 256, 256, 16
        $region80: #{tpu_custom_call.1} parent=51 // pred_fallthru
          _
      $region52: #{tpu_custom_call.1} parent=5 // pred_fallthru
        _
      %p959 = scmp.le.s32.totalorder 2, %s29
      // Predicated region
      $region81: #{tpu_custom_call.1} parent=5 // pred_check
        %p960 = pneg %p959
      $region82: #{tpu_custom_call.1} parent=5 // pred_check_branch
        %962 = sbr.rel (%p960) target = $region84
      $region83: #{tpu_custom_call.1} parent=5 // pred_region
        %s963 = ssub.s32 %s29, 2
        // Predicated region
        $region85: #{tpu_custom_call.1} parent=83 // pred_check
          %p964 = pneg %p294
        $region86: #{tpu_custom_call.1} parent=83 // pred_check_branch
          %966 = sbr.rel (%p964) target = $region88
        $region87: #{tpu_custom_call.1} parent=83 // pred_region
          %s967 = sand.u32 %s279, 1
          %s968 = scalar_lea.sflag [#allocation4], %s967
          %s969 = sand.u32 %s279, 1
          %s970 = smul.addr %s969, 256
          %s971 = scalar_lea.vmem [#allocation13], %s970
          %972 = dma.done %s968, 4096
        $region88: #{tpu_custom_call.1} parent=83 // pred_fallthru
          _
      $region84: #{tpu_custom_call.1} parent=5 // pred_fallthru
        _
    $region6: #{tpu_custom_call.1} parent=1 // loop_footer
      %s33 = sadd.s32 1, %s29
    $region7: #{tpu_custom_call.1} parent=1 // loop_footer_branch
      %28 = sbr.rel target = $region3
    $region8: #{tpu_custom_call.1} parent=1 // loop_exit
      _
    %973 = vsyncpa [#allocation3], 1
    %s974 = scalar_lea.sflag [#allocation3], 1
    %975 = vsyncpa %s974, 1
    %976 = vsyncpa [#allocation6], 1
    %s977 = scalar_lea.sflag [#allocation6], 1
    %978 = vsyncpa %s977, 1
    %979 = vsyncpa [#allocation9], 1
    %s980 = scalar_lea.sflag [#allocation9], 1
    %981 = vsyncpa %s980, 1
    %982 = vsyncpa [#allocation12], 1
    %s983 = scalar_lea.sflag [#allocation12], 1
    %984 = vsyncpa %s983, 1
    %985 = vsyncpa [#allocation4], 1
    %s986 = scalar_lea.sflag [#allocation4], 1
    %987 = vsyncpa %s986, 1

</llo_original>
